<compile_context>
chip_gen: v7x
topology: tpu7x:2x2x1
jax: 0.10.0
libtpu: 0.0.40
codegen_flags: <defaults>
</compile_context>

<pallas_src>
import numpy as np
import jax
import jax.numpy as jnp
from jax.experimental import pallas as pl
from jax.experimental.pallas import tpu as pltpu


REL_EMB_DIM = 32    # args.rel_emb_dim; also the bias-lane column index in the padded layout
D_PAD = 128         # lane-dense feature dim
OUT_PAD = 128       # lane-dense output dim (score lives in column 0)


# ----------------------------- Pallas kernel -------------------------------

def _rmpi_fused_kernel(emb_sel_ref, rel_emb_ref, w1_ref, w2_ref, a2_ref, a1_ref,
                       scat_ref, gath_ref, fcw_ref, out_ref, hw_ref):
    """Entire RMPI forward in one invocation (no grid). All operands in VMEM."""
    e_pad = emb_sel_ref.shape[0]
    n_modes = w1_ref.shape[0]

    # h0 = rel_emb[edge_type]   (one-hot @ embedding table; bias lane == 1 on real rows)
    h0 = jnp.dot(emb_sel_ref[...], rel_emb_ref[...], preferred_element_type=jnp.float32)

    def aggregate(h, w_ref, a_ref):
        # HW rows [i*E_pad, (i+1)*E_pad) = h @ W_i  (+ b_i via the bias lane).
        for i in range(n_modes):          # static unroll, tile-aligned (16,128) slices
            hw_ref[pl.ds(i * e_pad, e_pad), :] = jnp.dot(
                h, w_ref[i], preferred_element_type=jnp.float32)
        # relu( sum_i A_i @ (h @ W_i + b_i) )  ==  relu( A_cat @ HW )
        return jnp.maximum(
            jnp.dot(a_ref[...], hw_ref[...], preferred_element_type=jnp.float32), 0.0)

    h_0_n = aggregate(h0, w1_ref, a2_ref)                                 # (R2_pad, 128)
    # h1[neighbor_edges[j]] += h_0_N[j]     (scatter-add as a selection matmul)
    h1 = h0 + jnp.dot(scat_ref[...], h_0_n, preferred_element_type=jnp.float32)
    # h1_extracted = h1[rel_edge_ids]       (gather as a selection matmul)
    h1_ex = jnp.dot(gath_ref[...], h1, preferred_element_type=jnp.float32)
    h_1_n = aggregate(h1, w2_ref, a1_ref)                                 # (B_pad, 128)
    h2 = h1_ex + h_1_n

    # zero the bias lane / padding columns, then L2-normalize (rsqrt -> EUP slot)
    col = jax.lax.broadcasted_iota(jnp.int32, h2.shape, 1)
    h2f = jnp.where(col < REL_EMB_DIM, h2, 0.0)
    ss = jnp.sum(h2f * h2f, axis=-1, keepdims=True)
    g = h2f * jax.lax.rsqrt(jnp.maximum(ss, 1e-24))   # == x / max(||x||_2, 1e-12)
    # re-inject a constant-1 bias lane so the fc_layer bias folds into the matmul
    g = jnp.where(col == REL_EMB_DIM, 1.0, g)

    out_ref[...] = jnp.dot(g, fcw_ref[...], preferred_element_type=jnp.float32)


def rmpi_forward(emb_sel, rel_emb_aug, w1_aug, w2_aug, a2_cat, a1_cat,
                 scat, gath, fc_w_aug):
    e_pad = emb_sel.shape[0]
    d_pad = rel_emb_aug.shape[1]
    n_modes = w1_aug.shape[0]
    b_pad = a1_cat.shape[0]
    out_pad = fc_w_aug.shape[1]
    vmem = pl.BlockSpec(memory_space=pltpu.MemorySpace.VMEM)
    return pl.pallas_call(
        _rmpi_fused_kernel,
        out_shape=jax.ShapeDtypeStruct((b_pad, out_pad), jnp.float32),
        in_specs=[vmem] * 9,
        out_specs=vmem,
        scratch_shapes=[pltpu.VMEM((n_modes * e_pad, d_pad), jnp.float32)],
    )(emb_sel, rel_emb_aug, w1_aug, w2_aug, a2_cat, a1_cat, scat, gath, fc_w_aug)


# ----------------------------- graph glue (numpy) ---------------------------

def build_link_modes(src, dst, u_node, v_node, num_nodes, num_edges):
    """Dense replica of the sparse COO construction in RMPI.AggregateConv.

    Replicates torch.sparse_coo_tensor(...).to_dense()[nodes] semantics,
    including multiplicity when a node repeats in the query list (DGL
    in_edges/out_edges return duplicated edges; duplicates sum in to_dense).
    edge_dropout=0.0 -> the dropout edge mask is identically 1 and is omitted.
    """
    cnt_u = np.bincount(u_node, minlength=num_nodes).astype(np.float32)
    cnt_v = np.bincount(v_node, minlength=num_nodes).astype(np.float32)
    in_edge_out = (dst[None, :] == u_node[:, None]).astype(np.float32) * cnt_u[u_node][:, None]
    out_edge_out = (src[None, :] == u_node[:, None]).astype(np.float32) * cnt_u[u_node][:, None]
    in_edge_in = (dst[None, :] == v_node[:, None]).astype(np.float32) * cnt_v[v_node][:, None]
    out_edge_in = (src[None, :] == v_node[:, None]).astype(np.float32) * cnt_v[v_node][:, None]
    edge_mode_5 = out_edge_out * in_edge_in
    edge_mode_6 = in_edge_out * out_edge_in
    out_edge_out = out_edge_out - edge_mode_5
    in_edge_in = in_edge_in - edge_mode_5
    in_edge_out = in_edge_out - edge_mode_6
    out_edge_in = out_edge_in - edge_mode_6
    return np.stack(
        [in_edge_out, out_edge_out, in_edge_in, out_edge_in, edge_mode_5, edge_mode_6],
        axis=0,
    )


def _round_up(x, m):
    return ((x + m - 1) // m) * m


def concat_modes(A, r_pad, e_pad):
    """(L,R,E) per-mode matrices -> (r_pad, L*e_pad) horizontal concat, zero-padded."""
    L, R, E = A.shape
    out = np.zeros((r_pad, L * e_pad), np.float32)
    for i in range(L):
        out[:R, i * e_pad:i * e_pad + E] = A[i]
    return out


def augment_weights(Wt, b, d_pad):
    """Fold bias into the matmul: row REL_EMB_DIM (the bias lane) carries b_i."""
    Wt = np.asarray(Wt, np.float32)
    b = np.asarray(b, np.float32)
    L, D, _ = Wt.shape
    out = np.zeros((L, d_pad, d_pad), np.float32)
    out[:, :D, :D] = Wt
    out[:, D, :D] = b
    return out


# ----------------------------------- main -----------------------------------

if __name__ == "__main__":
    key = jax.random.PRNGKey(0)
    D = REL_EMB_DIM   # 32
    num_rel = 5       # args.num_rel
    B = 2             # number of target triples (head/tail node pairs)

    # --- synthetic batched enclosing subgraph (replaces DGL `en_g`) ---
    num_nodes = 8
    src = np.array([0, 4, 2, 1, 6, 5, 3, 7, 0, 2], dtype=np.int32)
    dst = np.array([1, 5, 0, 3, 4, 7, 2, 6, 5, 1], dtype=np.int32)
    num_edges = src.shape[0]
    etype = (np.arange(num_edges) % num_rel).astype(np.int32)        # en_g.edata['type']
    node_role = np.array([1, 2, 0, 0, 1, 2, 0, 0], dtype=np.int32)   # en_g.ndata['id']

    head_ids = np.nonzero(node_role == 1)[0].astype(np.int32)        # [0, 4]
    tail_ids = np.nonzero(node_role == 2)[0].astype(np.int32)        # [1, 5]

    # neighbor edges: edges incident (in or out) to any head/tail node, unique.
    targets = np.concatenate([head_ids, tail_ids])
    is_nb = np.isin(src, targets) | np.isin(dst, targets)
    neighbor_edges = np.unique(np.nonzero(is_nb)[0]).astype(np.int32)
    neighbor_u = src[neighbor_edges]
    neighbor_v = dst[neighbor_edges]
    R2 = neighbor_edges.shape[0]

    # rel_edge_ids[i] = en_g.edge_id(head_ids[i], tail_ids[i])
    rel_edge_ids = np.array(
        [np.nonzero((src == head_ids[i]) & (dst == tail_ids[i]))[0][0] for i in range(B)],
        dtype=np.int32,
    )

    # --- deterministic parameters (shapes per RMPI.__init__) ---
    keys = jax.random.split(key, 6)
    rel_emb = jax.random.normal(keys[0], (num_rel, D), jnp.float32)        # nn.Embedding
    W1t = jax.random.normal(keys[1], (6, D, D), jnp.float32) * 0.1          # fc_reld1 (W^T)
    b1 = jax.random.normal(keys[2], (6, D), jnp.float32) * 0.1
    W2t = jax.random.normal(keys[3], (6, D, D), jnp.float32) * 0.1          # fc_reld2 (W^T)
    b2 = jax.random.normal(keys[4], (6, D), jnp.float32) * 0.1
    kw, kb = jax.random.split(keys[5])
    fc_w = jax.random.normal(kw, (D, 1), jnp.float32) * 0.1                 # fc_layer (W^T)
    fc_b = jax.random.normal(kb, (1, 1), jnp.float32) * 0.1

    # --- link-mode incidence matrices (same semantics as the sparse torch path) ---
    A2 = build_link_modes(src, dst, neighbor_u, neighbor_v, num_nodes, num_edges)  # (6,R2,E)
    A1 = build_link_modes(src, dst, head_ids, tail_ids, num_nodes, num_edges)      # (6,B, E)

    # --- padded / lane-dense operand layout for the fused kernel -----------------
    E_PAD = _round_up(num_edges, 8)      # 10 -> 16
    NR_PAD = _round_up(num_rel, 8)       # 5  -> 8
    R2_PAD = _round_up(R2, 8)
    B_PAD = _round_up(B, 8)

    a2_cat = concat_modes(A2, R2_PAD, E_PAD)                 # (R2_pad, 6*E_pad)
    a1_cat = concat_modes(A1, B_PAD, E_PAD)                  # (B_pad,  6*E_pad)

    w1_aug = augment_weights(W1t, b1, D_PAD)                 # (6, 128, 128)
    w2_aug = augment_weights(W2t, b2, D_PAD)

    rel_emb_aug = np.zeros((NR_PAD, D_PAD), np.float32)      # embedding table + bias lane
    rel_emb_aug[:num_rel, :D] = np.asarray(rel_emb)
    rel_emb_aug[:num_rel, D] = 1.0

    emb_sel = np.zeros((E_PAD, NR_PAD), np.float32)          # one-hot(edge_type)
    emb_sel[np.arange(num_edges), etype] = 1.0

    scat = np.zeros((E_PAD, R2_PAD), np.float32)             # scatter h_0_N -> edge rows
    scat[neighbor_edges, np.arange(R2)] = 1.0

    gath = np.zeros((B_PAD, E_PAD), np.float32)              # gather rel_edge_ids rows
    gath[np.arange(B), rel_edge_ids] = 1.0

    fc_w_aug = np.zeros((D_PAD, OUT_PAD), np.float32)        # fc weight + bias on the bias lane
    fc_w_aug[:D, 0] = np.asarray(fc_w)[:, 0]
    fc_w_aug[D, 0] = float(np.asarray(fc_b)[0, 0])

    # --- fused forward (single pallas_call) ---
    out_pad = rmpi_forward(
        jnp.asarray(emb_sel), jnp.asarray(rel_emb_aug),
        jnp.asarray(w1_aug), jnp.asarray(w2_aug),
        jnp.asarray(a2_cat), jnp.asarray(a1_cat),
        jnp.asarray(scat), jnp.asarray(gath),
        jnp.asarray(fc_w_aug),
    )
    out_pad = jax.block_until_ready(out_pad)
    out = out_pad[:B, :1]                                    # (B, 1) scores

    # --- plain-JAX reference check (unpadded math, faithful to the torch forward) ---
    A2_j, A1_j = jnp.asarray(A2), jnp.asarray(A1)

    def ref_agg(A, h, Wt, b):
        return jax.nn.relu(sum(A[i] @ (h @ Wt[i] + b[i]) for i in range(6)))

    h0_ref = rel_emb[jnp.asarray(etype)]
    r0 = ref_agg(A2_j, h0_ref, W1t, b1)
    r1 = h0_ref.at[jnp.asarray(neighbor_edges)].add(r0)
    rh2 = r1[jnp.asarray(rel_edge_ids)] + ref_agg(A1_j, r1, W2t, b2)
    g_ref = rh2 / jnp.maximum(jnp.linalg.norm(rh2, axis=-1, keepdims=True), 1e-12)
    ref_out = g_ref @ fc_w + fc_b

    assert out.shape == (B, 1)
    assert jnp.allclose(out, ref_out, rtol=1e-3, atol=1e-3), (out, ref_out)

    print("KERNEL_OK")
</pallas_src>

<mosaic_0001>
module attributes {stable_mosaic.version = 11 : i64} {
  func.func @_rmpi_fused_kernel(%arg0: memref<16x8xf32, #tpu.memory_space<vmem>>, %arg1: memref<8x128xf32, #tpu.memory_space<vmem>>, %arg2: memref<6x128x128xf32, #tpu.memory_space<vmem>>, %arg3: memref<6x128x128xf32, #tpu.memory_space<vmem>>, %arg4: memref<8x96xf32, #tpu.memory_space<vmem>>, %arg5: memref<8x96xf32, #tpu.memory_space<vmem>>, %arg6: memref<16x8xf32, #tpu.memory_space<vmem>>, %arg7: memref<8x16xf32, #tpu.memory_space<vmem>>, %arg8: memref<128x128xf32, #tpu.memory_space<vmem>>, %arg9: memref<8x128xf32, #tpu.memory_space<vmem>>, %arg10: memref<96x128xf32, #tpu.memory_space<vmem>>) attributes {dimension_semantics = [], scalar_prefetch = 0 : i64, scratch_operands = 1 : i64, tpu.core_type = #tpu.core_type<tc>} {
    %c0 = arith.constant 0 : index
    %c0_0 = arith.constant 0 : index
    %0 = vector.load %arg0[%c0, %c0_0] : memref<16x8xf32, #tpu.memory_space<vmem>>, vector<16x8xf32>
    %c0_1 = arith.constant 0 : index
    %c0_2 = arith.constant 0 : index
    %1 = vector.load %arg1[%c0_1, %c0_2] : memref<8x128xf32, #tpu.memory_space<vmem>>, vector<8x128xf32>
    %cst = arith.constant dense<0.000000e+00> : vector<16x128xf32>
    %2 = tpu.matmul %0, %1, %cst {dimension_numbers = #tpu.dot_dimension_numbers<[1], [0], [0], [1], [0, 0, 1, 1], [], []>} : vector<16x8xf32>, vector<8x128xf32>, vector<16x128xf32> -> vector<16x128xf32>
    %c0_3 = arith.constant 0 : index
    %c0_4 = arith.constant 0 : index
    %c0_5 = arith.constant 0 : index
    %3 = vector.load %arg2[%c0_3, %c0_4, %c0_5] : memref<6x128x128xf32, #tpu.memory_space<vmem>>, vector<1x128x128xf32>
    %4 = vector.shape_cast %3 : vector<1x128x128xf32> to vector<128x128xf32>
    %cst_6 = arith.constant dense<0.000000e+00> : vector<16x128xf32>
    %5 = tpu.matmul %2, %4, %cst_6 {dimension_numbers = #tpu.dot_dimension_numbers<[1], [0], [0], [1], [0, 0, 1, 1], [], []>} : vector<16x128xf32>, vector<128x128xf32>, vector<16x128xf32> -> vector<16x128xf32>
    %c0_7 = arith.constant 0 : index
    %c0_8 = arith.constant 0 : index
    %6 = vector.load %arg10[%c0_7, %c0_8] : memref<96x128xf32, #tpu.memory_space<vmem>>, vector<16x128xf32>
    tpu.vector_store %arg10[%c0_7, %c0_8], %5 {strides = array<i32>} : memref<96x128xf32, #tpu.memory_space<vmem>>, vector<16x128xf32>,
    %c1 = arith.constant 1 : index
    %c0_9 = arith.constant 0 : index
    %c0_10 = arith.constant 0 : index
    %7 = vector.load %arg2[%c1, %c0_9, %c0_10] : memref<6x128x128xf32, #tpu.memory_space<vmem>>, vector<1x128x128xf32>
    %8 = vector.shape_cast %7 : vector<1x128x128xf32> to vector<128x128xf32>
    %cst_11 = arith.constant dense<0.000000e+00> : vector<16x128xf32>
    %9 = tpu.matmul %2, %8, %cst_11 {dimension_numbers = #tpu.dot_dimension_numbers<[1], [0], [0], [1], [0, 0, 1, 1], [], []>} : vector<16x128xf32>, vector<128x128xf32>, vector<16x128xf32> -> vector<16x128xf32>
    %c16 = arith.constant 16 : index
    %c0_12 = arith.constant 0 : index
    %10 = vector.load %arg10[%c16, %c0_12] : memref<96x128xf32, #tpu.memory_space<vmem>>, vector<16x128xf32>
    tpu.vector_store %arg10[%c16, %c0_12], %9 {strides = array<i32>} : memref<96x128xf32, #tpu.memory_space<vmem>>, vector<16x128xf32>,
    %c2 = arith.constant 2 : index
    %c0_13 = arith.constant 0 : index
    %c0_14 = arith.constant 0 : index
    %11 = vector.load %arg2[%c2, %c0_13, %c0_14] : memref<6x128x128xf32, #tpu.memory_space<vmem>>, vector<1x128x128xf32>
    %12 = vector.shape_cast %11 : vector<1x128x128xf32> to vector<128x128xf32>
    %cst_15 = arith.constant dense<0.000000e+00> : vector<16x128xf32>
    %13 = tpu.matmul %2, %12, %cst_15 {dimension_numbers = #tpu.dot_dimension_numbers<[1], [0], [0], [1], [0, 0, 1, 1], [], []>} : vector<16x128xf32>, vector<128x128xf32>, vector<16x128xf32> -> vector<16x128xf32>
    %c32 = arith.constant 32 : index
    %c0_16 = arith.constant 0 : index
    %14 = vector.load %arg10[%c32, %c0_16] : memref<96x128xf32, #tpu.memory_space<vmem>>, vector<16x128xf32>
    tpu.vector_store %arg10[%c32, %c0_16], %13 {strides = array<i32>} : memref<96x128xf32, #tpu.memory_space<vmem>>, vector<16x128xf32>,
    %c3 = arith.constant 3 : index
    %c0_17 = arith.constant 0 : index
    %c0_18 = arith.constant 0 : index
    %15 = vector.load %arg2[%c3, %c0_17, %c0_18] : memref<6x128x128xf32, #tpu.memory_space<vmem>>, vector<1x128x128xf32>
    %16 = vector.shape_cast %15 : vector<1x128x128xf32> to vector<128x128xf32>
    %cst_19 = arith.constant dense<0.000000e+00> : vector<16x128xf32>
    %17 = tpu.matmul %2, %16, %cst_19 {dimension_numbers = #tpu.dot_dimension_numbers<[1], [0], [0], [1], [0, 0, 1, 1], [], []>} : vector<16x128xf32>, vector<128x128xf32>, vector<16x128xf32> -> vector<16x128xf32>
    %c48 = arith.constant 48 : index
    %c0_20 = arith.constant 0 : index
    %18 = vector.load %arg10[%c48, %c0_20] : memref<96x128xf32, #tpu.memory_space<vmem>>, vector<16x128xf32>
    tpu.vector_store %arg10[%c48, %c0_20], %17 {strides = array<i32>} : memref<96x128xf32, #tpu.memory_space<vmem>>, vector<16x128xf32>,
    %c4 = arith.constant 4 : index
    %c0_21 = arith.constant 0 : index
    %c0_22 = arith.constant 0 : index
    %19 = vector.load %arg2[%c4, %c0_21, %c0_22] : memref<6x128x128xf32, #tpu.memory_space<vmem>>, vector<1x128x128xf32>
    %20 = vector.shape_cast %19 : vector<1x128x128xf32> to vector<128x128xf32>
    %cst_23 = arith.constant dense<0.000000e+00> : vector<16x128xf32>
    %21 = tpu.matmul %2, %20, %cst_23 {dimension_numbers = #tpu.dot_dimension_numbers<[1], [0], [0], [1], [0, 0, 1, 1], [], []>} : vector<16x128xf32>, vector<128x128xf32>, vector<16x128xf32> -> vector<16x128xf32>
    %c64 = arith.constant 64 : index
    %c0_24 = arith.constant 0 : index
    %22 = vector.load %arg10[%c64, %c0_24] : memref<96x128xf32, #tpu.memory_space<vmem>>, vector<16x128xf32>
    tpu.vector_store %arg10[%c64, %c0_24], %21 {strides = array<i32>} : memref<96x128xf32, #tpu.memory_space<vmem>>, vector<16x128xf32>,
    %c5 = arith.constant 5 : index
    %c0_25 = arith.constant 0 : index
    %c0_26 = arith.constant 0 : index
    %23 = vector.load %arg2[%c5, %c0_25, %c0_26] : memref<6x128x128xf32, #tpu.memory_space<vmem>>, vector<1x128x128xf32>
    %24 = vector.shape_cast %23 : vector<1x128x128xf32> to vector<128x128xf32>
    %cst_27 = arith.constant dense<0.000000e+00> : vector<16x128xf32>
    %25 = tpu.matmul %2, %24, %cst_27 {dimension_numbers = #tpu.dot_dimension_numbers<[1], [0], [0], [1], [0, 0, 1, 1], [], []>} : vector<16x128xf32>, vector<128x128xf32>, vector<16x128xf32> -> vector<16x128xf32>
    %c80 = arith.constant 80 : index
    %c0_28 = arith.constant 0 : index
    %26 = vector.load %arg10[%c80, %c0_28] : memref<96x128xf32, #tpu.memory_space<vmem>>, vector<16x128xf32>
    tpu.vector_store %arg10[%c80, %c0_28], %25 {strides = array<i32>} : memref<96x128xf32, #tpu.memory_space<vmem>>, vector<16x128xf32>,
    %c0_29 = arith.constant 0 : index
    %c0_30 = arith.constant 0 : index
    %27 = vector.load %arg4[%c0_29, %c0_30] : memref<8x96xf32, #tpu.memory_space<vmem>>, vector<8x96xf32>
    %c0_31 = arith.constant 0 : index
    %c0_32 = arith.constant 0 : index
    %28 = vector.load %arg10[%c0_31, %c0_32] : memref<96x128xf32, #tpu.memory_space<vmem>>, vector<96x128xf32>
    %cst_33 = arith.constant dense<0.000000e+00> : vector<8x128xf32>
    %29 = tpu.matmul %27, %28, %cst_33 {dimension_numbers = #tpu.dot_dimension_numbers<[1], [0], [0], [1], [0, 0, 1, 1], [], []>} : vector<8x96xf32>, vector<96x128xf32>, vector<8x128xf32> -> vector<8x128xf32>
    %cst_34 = arith.constant 0.000000e+00 : f32
    %30 = vector.broadcast %cst_34 : f32 to vector<8x128xf32>
    %31 = arith.maximumf %29, %30 : vector<8x128xf32>
    %c0_35 = arith.constant 0 : index
    %c0_36 = arith.constant 0 : index
    %32 = vector.load %arg6[%c0_35, %c0_36] : memref<16x8xf32, #tpu.memory_space<vmem>>, vector<16x8xf32>
    %cst_37 = arith.constant dense<0.000000e+00> : vector<16x128xf32>
    %33 = tpu.matmul %32, %31, %cst_37 {dimension_numbers = #tpu.dot_dimension_numbers<[1], [0], [0], [1], [0, 0, 1, 1], [], []>} : vector<16x8xf32>, vector<8x128xf32>, vector<16x128xf32> -> vector<16x128xf32>
    %34 = arith.addf %2, %33 : vector<16x128xf32>
    %c0_38 = arith.constant 0 : index
    %c0_39 = arith.constant 0 : index
    %35 = vector.load %arg7[%c0_38, %c0_39] : memref<8x16xf32, #tpu.memory_space<vmem>>, vector<8x16xf32>
    %cst_40 = arith.constant dense<0.000000e+00> : vector<8x128xf32>
    %36 = tpu.matmul %35, %34, %cst_40 {dimension_numbers = #tpu.dot_dimension_numbers<[1], [0], [0], [1], [0, 0, 1, 1], [], []>} : vector<8x16xf32>, vector<16x128xf32>, vector<8x128xf32> -> vector<8x128xf32>
    %c0_41 = arith.constant 0 : index
    %c0_42 = arith.constant 0 : index
    %c0_43 = arith.constant 0 : index
    %37 = vector.load %arg3[%c0_41, %c0_42, %c0_43] : memref<6x128x128xf32, #tpu.memory_space<vmem>>, vector<1x128x128xf32>
    %38 = vector.shape_cast %37 : vector<1x128x128xf32> to vector<128x128xf32>
    %cst_44 = arith.constant dense<0.000000e+00> : vector<16x128xf32>
    %39 = tpu.matmul %34, %38, %cst_44 {dimension_numbers = #tpu.dot_dimension_numbers<[1], [0], [0], [1], [0, 0, 1, 1], [], []>} : vector<16x128xf32>, vector<128x128xf32>, vector<16x128xf32> -> vector<16x128xf32>
    %c0_45 = arith.constant 0 : index
    %c0_46 = arith.constant 0 : index
    %40 = vector.load %arg10[%c0_45, %c0_46] : memref<96x128xf32, #tpu.memory_space<vmem>>, vector<16x128xf32>
    tpu.vector_store %arg10[%c0_45, %c0_46], %39 {strides = array<i32>} : memref<96x128xf32, #tpu.memory_space<vmem>>, vector<16x128xf32>,
    %c1_47 = arith.constant 1 : index
    %c0_48 = arith.constant 0 : index
    %c0_49 = arith.constant 0 : index
    %41 = vector.load %arg3[%c1_47, %c0_48, %c0_49] : memref<6x128x128xf32, #tpu.memory_space<vmem>>, vector<1x128x128xf32>
    %42 = vector.shape_cast %41 : vector<1x128x128xf32> to vector<128x128xf32>
    %cst_50 = arith.constant dense<0.000000e+00> : vector<16x128xf32>
    %43 = tpu.matmul %34, %42, %cst_50 {dimension_numbers = #tpu.dot_dimension_numbers<[1], [0], [0], [1], [0, 0, 1, 1], [], []>} : vector<16x128xf32>, vector<128x128xf32>, vector<16x128xf32> -> vector<16x128xf32>
    %c16_51 = arith.constant 16 : index
    %c0_52 = arith.constant 0 : index
    %44 = vector.load %arg10[%c16_51, %c0_52] : memref<96x128xf32, #tpu.memory_space<vmem>>, vector<16x128xf32>
    tpu.vector_store %arg10[%c16_51, %c0_52], %43 {strides = array<i32>} : memref<96x128xf32, #tpu.memory_space<vmem>>, vector<16x128xf32>,
    %c2_53 = arith.constant 2 : index
    %c0_54 = arith.constant 0 : index
    %c0_55 = arith.constant 0 : index
    %45 = vector.load %arg3[%c2_53, %c0_54, %c0_55] : memref<6x128x128xf32, #tpu.memory_space<vmem>>, vector<1x128x128xf32>
    %46 = vector.shape_cast %45 : vector<1x128x128xf32> to vector<128x128xf32>
    %cst_56 = arith.constant dense<0.000000e+00> : vector<16x128xf32>
    %47 = tpu.matmul %34, %46, %cst_56 {dimension_numbers = #tpu.dot_dimension_numbers<[1], [0], [0], [1], [0, 0, 1, 1], [], []>} : vector<16x128xf32>, vector<128x128xf32>, vector<16x128xf32> -> vector<16x128xf32>
    %c32_57 = arith.constant 32 : index
    %c0_58 = arith.constant 0 : index
    %48 = vector.load %arg10[%c32_57, %c0_58] : memref<96x128xf32, #tpu.memory_space<vmem>>, vector<16x128xf32>
    tpu.vector_store %arg10[%c32_57, %c0_58], %47 {strides = array<i32>} : memref<96x128xf32, #tpu.memory_space<vmem>>, vector<16x128xf32>,
    %c3_59 = arith.constant 3 : index
    %c0_60 = arith.constant 0 : index
    %c0_61 = arith.constant 0 : index
    %49 = vector.load %arg3[%c3_59, %c0_60, %c0_61] : memref<6x128x128xf32, #tpu.memory_space<vmem>>, vector<1x128x128xf32>
    %50 = vector.shape_cast %49 : vector<1x128x128xf32> to vector<128x128xf32>
    %cst_62 = arith.constant dense<0.000000e+00> : vector<16x128xf32>
    %51 = tpu.matmul %34, %50, %cst_62 {dimension_numbers = #tpu.dot_dimension_numbers<[1], [0], [0], [1], [0, 0, 1, 1], [], []>} : vector<16x128xf32>, vector<128x128xf32>, vector<16x128xf32> -> vector<16x128xf32>
    %c48_63 = arith.constant 48 : index
    %c0_64 = arith.constant 0 : index
    %52 = vector.load %arg10[%c48_63, %c0_64] : memref<96x128xf32, #tpu.memory_space<vmem>>, vector<16x128xf32>
    tpu.vector_store %arg10[%c48_63, %c0_64], %51 {strides = array<i32>} : memref<96x128xf32, #tpu.memory_space<vmem>>, vector<16x128xf32>,
    %c4_65 = arith.constant 4 : index
    %c0_66 = arith.constant 0 : index
    %c0_67 = arith.constant 0 : index
    %53 = vector.load %arg3[%c4_65, %c0_66, %c0_67] : memref<6x128x128xf32, #tpu.memory_space<vmem>>, vector<1x128x128xf32>
    %54 = vector.shape_cast %53 : vector<1x128x128xf32> to vector<128x128xf32>
    %cst_68 = arith.constant dense<0.000000e+00> : vector<16x128xf32>
    %55 = tpu.matmul %34, %54, %cst_68 {dimension_numbers = #tpu.dot_dimension_numbers<[1], [0], [0], [1], [0, 0, 1, 1], [], []>} : vector<16x128xf32>, vector<128x128xf32>, vector<16x128xf32> -> vector<16x128xf32>
    %c64_69 = arith.constant 64 : index
    %c0_70 = arith.constant 0 : index
    %56 = vector.load %arg10[%c64_69, %c0_70] : memref<96x128xf32, #tpu.memory_space<vmem>>, vector<16x128xf32>
    tpu.vector_store %arg10[%c64_69, %c0_70], %55 {strides = array<i32>} : memref<96x128xf32, #tpu.memory_space<vmem>>, vector<16x128xf32>,
    %c5_71 = arith.constant 5 : index
    %c0_72 = arith.constant 0 : index
    %c0_73 = arith.constant 0 : index
    %57 = vector.load %arg3[%c5_71, %c0_72, %c0_73] : memref<6x128x128xf32, #tpu.memory_space<vmem>>, vector<1x128x128xf32>
    %58 = vector.shape_cast %57 : vector<1x128x128xf32> to vector<128x128xf32>
    %cst_74 = arith.constant dense<0.000000e+00> : vector<16x128xf32>
    %59 = tpu.matmul %34, %58, %cst_74 {dimension_numbers = #tpu.dot_dimension_numbers<[1], [0], [0], [1], [0, 0, 1, 1], [], []>} : vector<16x128xf32>, vector<128x128xf32>, vector<16x128xf32> -> vector<16x128xf32>
    %c80_75 = arith.constant 80 : index
    %c0_76 = arith.constant 0 : index
    %60 = vector.load %arg10[%c80_75, %c0_76] : memref<96x128xf32, #tpu.memory_space<vmem>>, vector<16x128xf32>
    tpu.vector_store %arg10[%c80_75, %c0_76], %59 {strides = array<i32>} : memref<96x128xf32, #tpu.memory_space<vmem>>, vector<16x128xf32>,
    %c0_77 = arith.constant 0 : index
    %c0_78 = arith.constant 0 : index
    %61 = vector.load %arg5[%c0_77, %c0_78] : memref<8x96xf32, #tpu.memory_space<vmem>>, vector<8x96xf32>
    %c0_79 = arith.constant 0 : index
    %c0_80 = arith.constant 0 : index
    %62 = vector.load %arg10[%c0_79, %c0_80] : memref<96x128xf32, #tpu.memory_space<vmem>>, vector<96x128xf32>
    %cst_81 = arith.constant dense<0.000000e+00> : vector<8x128xf32>
    %63 = tpu.matmul %61, %62, %cst_81 {dimension_numbers = #tpu.dot_dimension_numbers<[1], [0], [0], [1], [0, 0, 1, 1], [], []>} : vector<8x96xf32>, vector<96x128xf32>, vector<8x128xf32> -> vector<8x128xf32>
    %cst_82 = arith.constant 0.000000e+00 : f32
    %64 = vector.broadcast %cst_82 : f32 to vector<8x128xf32>
    %65 = arith.maximumf %63, %64 : vector<8x128xf32>
    %66 = arith.addf %36, %65 : vector<8x128xf32>
    %67 = tpu.iota {dimensions = array<i32: 1>} : vector<8x128xi32>
    %c32_i32 = arith.constant 32 : i32
    %68 = vector.broadcast %c32_i32 : i32 to vector<8x128xi32>
    %69 = arith.cmpi slt, %67, %68 : vector<8x128xi32>
    %cst_83 = arith.constant 0.000000e+00 : f32
    %70 = vector.broadcast %cst_83 : f32 to vector<8x128xf32>
    %71 = arith.select %69, %66, %70 : vector<8x128xi1>, vector<8x128xf32>
    %72 = arith.mulf %71, %71 : vector<8x128xf32>
    %cst_84 = arith.constant dense<0.000000e+00> : vector<8xf32>
    %73 = vector.multi_reduction <add>, %72, %cst_84 [1] : vector<8x128xf32> to vector<8xf32>
    %74 = vector.shape_cast %73 : vector<8xf32> to vector<8x1xf32>
    %cst_85 = arith.constant 1.000000e-24 : f32
    %75 = vector.broadcast %cst_85 : f32 to vector<8x1xf32>
    %76 = arith.maximumf %74, %75 : vector<8x1xf32>
    %77 = math.rsqrt %76 : vector<8x1xf32>
    %78 = vector.broadcast %77 : vector<8x1xf32> to vector<8x128xf32>
    %79 = arith.mulf %71, %78 : vector<8x128xf32>
    %c32_i32_86 = arith.constant 32 : i32
    %80 = vector.broadcast %c32_i32_86 : i32 to vector<8x128xi32>
    %81 = arith.cmpi eq, %67, %80 : vector<8x128xi32>
    %cst_87 = arith.constant 1.000000e+00 : f32
    %82 = vector.broadcast %cst_87 : f32 to vector<8x128xf32>
    %83 = arith.select %81, %82, %79 : vector<8x128xi1>, vector<8x128xf32>
    %c0_88 = arith.constant 0 : index
    %c0_89 = arith.constant 0 : index
    %84 = vector.load %arg8[%c0_88, %c0_89] : memref<128x128xf32, #tpu.memory_space<vmem>>, vector<128x128xf32>
    %cst_90 = arith.constant dense<0.000000e+00> : vector<8x128xf32>
    %85 = tpu.matmul %83, %84, %cst_90 {dimension_numbers = #tpu.dot_dimension_numbers<[1], [0], [0], [1], [0, 0, 1, 1], [], []>} : vector<8x128xf32>, vector<128x128xf32>, vector<8x128xf32> -> vector<8x128xf32>
    %c0_91 = arith.constant 0 : index
    %c0_92 = arith.constant 0 : index
    %86 = vector.load %arg9[%c0_91, %c0_92] : memref<8x128xf32, #tpu.memory_space<vmem>>, vector<8x128xf32>
    tpu.vector_store %arg9[%c0_91, %c0_92], %85 {strides = array<i32>} : memref<8x128xf32, #tpu.memory_space<vmem>>, vector<8x128xf32>,
    return
  }
}

</mosaic_0001>

<llo_original>
// kernel: tpu_custom_call.1
$region0: #{tpu_custom_call.1}
  #allocation0 [shape = 'u32[]', space=smem, size = 0x4, offset = 0x4, fixed_abs, tag = 'smem constant byte address 0x4 - core index']
  #allocation1 [shape = 'u32[144,128]{1,0:T(1,128)}', space=vmem, size = 0x12000, scoped, tag = 'internal scratch']
  #allocation2 [shape = 'f32[96,128]{1,0:T(8,128)}', space=vmem, size = 0xc000, scoped, tag = 'scratch operand']
  %s0 = inlined_call_operand.vmem [shape: f32[16,8], index: 0, kind: input, shape index: {}]
  %s1 = inlined_call_operand.vmem [shape: f32[8,128], index: 1, kind: input, shape index: {}]
  %s2 = inlined_call_operand.hbm [shape: f32[6,128,128], index: 2, kind: input, shape index: {}]
  %s3 = inlined_call_operand.hbm [shape: f32[6,128,128], index: 3, kind: input, shape index: {}]
  %s4 = inlined_call_operand.vmem [shape: f32[8,96], index: 4, kind: input, shape index: {}]
  %s5 = inlined_call_operand.vmem [shape: f32[8,96], index: 5, kind: input, shape index: {}]
  %s6 = inlined_call_operand.vmem [shape: f32[16,8], index: 6, kind: input, shape index: {}]
  %s7 = inlined_call_operand.vmem [shape: f32[8,16], index: 7, kind: input, shape index: {}]
  %s8 = inlined_call_operand.hbm [shape: f32[128,128], index: 8, kind: input, shape index: {}]
  %s9 = inlined_call_operand.hbm [shape: f32[8,128], index: 9, kind: output, shape index: {}]
  %s10 = sld [smem:[#allocation0]]
  $region58: #{tpu_custom_call.1} parent=0
    _
  %s12 = ssub.s32 1, %s10
  %s13 = scalar_select 0, %s12, %s10
  $region1: #{tpu_custom_call.1} parent=0
    #allocation3 [shape = 'u8[393216]{0}', space=vmem, size = 0x60000, scoped, tag = 'input window, operand 2, single buffered']
    #allocation4 [shape = 's32[1]{0}', space=sflag, size = 0x4, scoped, tag = 'scoped memory for tpu_custom_call.1']
    #allocation5 [shape = 's32[1]{0}', space=sflag, size = 0x4, scoped, tag = 'scoped memory for tpu_custom_call.1']
    #allocation6 [shape = 'u8[393216]{0}', space=vmem, size = 0x60000, scoped, tag = 'input window, operand 3, single buffered']
    #allocation7 [shape = 's32[1]{0}', space=sflag, size = 0x4, scoped, tag = 'scoped memory for tpu_custom_call.1']
    #allocation8 [shape = 'u8[65536]{0}', space=vmem, size = 0x10000, scoped, tag = 'input window, operand 8, single buffered']
    #allocation9 [shape = 'u8[4096]{0}', space=vmem, size = 0x1000, scoped, tag = 'output window, operand 0, single buffered']
    %14 = vsyncpa [#allocation4], 0
    %15 = vsyncpa [#allocation7], 0
    %16 = vsyncpa [#allocation5], 0
    // Predicated region
    $region2: #{tpu_custom_call.1} parent=1 // pred_check
      _
    $region3: #{tpu_custom_call.1} parent=1 // pred_check_branch
      %18 = sbr.rel (0) target = $region5
    $region4: #{tpu_custom_call.1} parent=1 // pred_region
      _
    $region5: #{tpu_custom_call.1} parent=1 // pred_fallthru
      _
    // Predicated region
    $region6: #{tpu_custom_call.1} parent=1 // pred_check
      _
    $region7: #{tpu_custom_call.1} parent=1 // pred_check_branch
      %20 = sbr.rel (0) target = $region9
    $region8: #{tpu_custom_call.1} parent=1 // pred_region
      _
    $region9: #{tpu_custom_call.1} parent=1 // pred_fallthru
      _
    // Predicated region
    $region10: #{tpu_custom_call.1} parent=1 // pred_check
      _
    $region11: #{tpu_custom_call.1} parent=1 // pred_check_branch
      %22 = sbr.rel (0) target = $region13
    $region12: #{tpu_custom_call.1} parent=1 // pred_region
      %s24 = ssub.s32 12288, 12288
      %25 = vsyncadd [#allocation4], %s24
      %s26 = sshll.u32 [#allocation3], 4
      %s27 = int_to_ptr.vmem [resolvable:$true] %s26
      %32 = dma.hbm_to_vmem [thread:$0]  %s2, 12288, %s27, [#allocation4], 128, 128, 8
    $region13: #{tpu_custom_call.1} parent=1 // pred_fallthru
      _
    // Predicated region
    $region14: #{tpu_custom_call.1} parent=1 // pred_check
      _
    $region15: #{tpu_custom_call.1} parent=1 // pred_check_branch
      %34 = sbr.rel (0) target = $region17
    $region16: #{tpu_custom_call.1} parent=1 // pred_region
      %s36 = ssub.s32 12288, 12288
      %37 = vsyncadd [#allocation7], %s36
      %s38 = sshll.u32 [#allocation6], 4
      %s39 = int_to_ptr.vmem [resolvable:$true] %s38
      %44 = dma.hbm_to_vmem [thread:$0]  %s3, 12288, %s39, [#allocation7], 128, 128, 8
    $region17: #{tpu_custom_call.1} parent=1 // pred_fallthru
      _
    // Predicated region
    $region18: #{tpu_custom_call.1} parent=1 // pred_check
      _
    $region19: #{tpu_custom_call.1} parent=1 // pred_check_branch
      %46 = sbr.rel (0) target = $region21
    $region20: #{tpu_custom_call.1} parent=1 // pred_region
      _
    $region21: #{tpu_custom_call.1} parent=1 // pred_fallthru
      _
    // Predicated region
    $region22: #{tpu_custom_call.1} parent=1 // pred_check
      _
    $region23: #{tpu_custom_call.1} parent=1 // pred_check_branch
      %48 = sbr.rel (0) target = $region25
    $region24: #{tpu_custom_call.1} parent=1 // pred_region
      _
    $region25: #{tpu_custom_call.1} parent=1 // pred_fallthru
      _
    // Predicated region
    $region26: #{tpu_custom_call.1} parent=1 // pred_check
      _
    $region27: #{tpu_custom_call.1} parent=1 // pred_check_branch
      %50 = sbr.rel (0) target = $region29
    $region28: #{tpu_custom_call.1} parent=1 // pred_region
      _
    $region29: #{tpu_custom_call.1} parent=1 // pred_fallthru
      _
    // Predicated region
    $region30: #{tpu_custom_call.1} parent=1 // pred_check
      _
    $region31: #{tpu_custom_call.1} parent=1 // pred_check_branch
      %52 = sbr.rel (0) target = $region33
    $region32: #{tpu_custom_call.1} parent=1 // pred_region
      _
    $region33: #{tpu_custom_call.1} parent=1 // pred_fallthru
      _
    // Predicated region
    $region34: #{tpu_custom_call.1} parent=1 // pred_check
      _
    $region35: #{tpu_custom_call.1} parent=1 // pred_check_branch
      %54 = sbr.rel (0) target = $region37
    $region36: #{tpu_custom_call.1} parent=1 // pred_region
      %s56 = ssub.s32 2048, 2048
      %57 = vsyncadd [#allocation7], %s56
      %s58 = sshll.u32 [#allocation8], 4
      %s59 = int_to_ptr.vmem [resolvable:$true] %s58
      %64 = dma.hbm_to_vmem [thread:$0]  %s8, 2048, %s59, [#allocation7], 128, 128, 8
    $region37: #{tpu_custom_call.1} parent=1 // pred_fallthru
      _
    // Predicated region
    $region38: #{tpu_custom_call.1} parent=1 // pred_check
      _
    $region39: #{tpu_custom_call.1} parent=1 // pred_check_branch
      %66 = sbr.rel (0) target = $region41
    $region40: #{tpu_custom_call.1} parent=1 // pred_region
      %67 = dma.done [#allocation4], 12288
    $region41: #{tpu_custom_call.1} parent=1 // pred_fallthru
      _
    // Predicated region
    $region42: #{tpu_custom_call.1} parent=1 // pred_check
      _
    $region43: #{tpu_custom_call.1} parent=1 // pred_check_branch
      %69 = sbr.rel (0) target = $region45
    $region44: #{tpu_custom_call.1} parent=1 // pred_region
      %70 = dma.done [#allocation7], 12288
    $region45: #{tpu_custom_call.1} parent=1 // pred_fallthru
      _
    // Predicated region
    $region46: #{tpu_custom_call.1} parent=1 // pred_check
      _
    $region47: #{tpu_custom_call.1} parent=1 // pred_check_branch
      %72 = sbr.rel (0) target = $region49
    $region48: #{tpu_custom_call.1} parent=1 // pred_region
      %73 = dma.done [#allocation7], 2048
    $region49: #{tpu_custom_call.1} parent=1 // pred_fallthru
      _
    %v74 = vld [vmem:[%s0] sm:$0xff]
    %v75 = vld [vmem:[%s0 + $0x8] sm:$0xff]
    %v76 = vld [vmem:[%s1] sm:$0xff]
    %vm77 = vcmask 64512
    %v79 = vsel %vm77, %v74, 0
    %v82 = vsel %vm77, %v75, 0
    %84 = vmatprep.subr.mxu0 0.0
    %85 = vmatpush1.msra.mxu0 %v76
    %86 = vmatprep.subr.mxu0 0.0
    %87 = vmatpush1.msra.mxu0 0.0
    %88 = vmatprep.subr.mxu0 0.0
    %89 = vmatpush1.msra.mxu0 0.0
    %90 = vmatprep.subr.mxu0 0.0
    %91 = vmatpush1.msra.mxu0 0.0
    %92 = vmatprep.subr.mxu0 0.0
    %93 = vmatpush1.msra.mxu0 0.0
    %94 = vmatprep.subr.mxu0 0.0
    %95 = vmatpush1.msra.mxu0 0.0
    %96 = vmatprep.subr.mxu0 0.0
    %97 = vmatpush1.msra.mxu0 0.0
    %98 = vmatprep.subr.mxu0 0.0
    %99 = vmatpush1.msra.mxu0 0.0
    %100 = vmatprep.subr.mxu0 0.0
    %101 = vmatpush1.msra.mxu0 0.0
    %102 = vmatprep.subr.mxu0 0.0
    %103 = vmatpush1.msra.mxu0 0.0
    %104 = vmatprep.subr.mxu0 0.0
    %105 = vmatpush1.msra.mxu0 0.0
    %106 = vmatprep.subr.mxu0 0.0
    %107 = vmatpush1.msra.mxu0 0.0
    %108 = vmatprep.subr.mxu0 0.0
    %109 = vmatpush1.msra.mxu0 0.0
    %110 = vmatprep.subr.mxu0 0.0
    %111 = vmatpush1.msra.mxu0 0.0
    %112 = vmatprep.subr.mxu0 0.0
    %113 = vmatpush1.msra.mxu0 0.0
    %114 = vmatprep.subr.mxu0 0.0
    %115 = vmatpush1.msra.mxu0 0.0
    %116 = vmatprep.subr.mxu0 0.0
    %117 = vmatpush1.msra.mxu0 0.0
    %118 = vmatprep.subr.mxu0 0.0
    %119 = vmatpush1.msra.mxu0 0.0
    %120 = vmatprep.subr.mxu0 0.0
    %121 = vmatpush1.msra.mxu0 0.0
    %122 = vmatprep.subr.mxu0 0.0
    %123 = vmatpush1.msra.mxu0 0.0
    %124 = vmatprep.subr.mxu0 0.0
    %125 = vmatpush1.msra.mxu0 0.0
    %126 = vmatprep.subr.mxu0 0.0
    %127 = vmatpush1.msra.mxu0 0.0
    %128 = vmatprep.subr.mxu0 0.0
    %129 = vmatpush1.msra.mxu0 0.0
    %130 = vmatprep.subr.mxu0 0.0
    %131 = vmatpush1.msra.mxu0 0.0
    %132 = vmatprep.subr.mxu0 0.0
    %133 = vmatpush1.msra.mxu0 0.0
    %134 = vmatprep.subr.mxu0 0.0
    %135 = vmatpush1.msra.mxu0 0.0
    %136 = vmatprep.subr.mxu0 0.0
    %137 = vmatpush1.msra.mxu0 0.0
    %138 = vmatprep.subr.mxu0 0.0
    %139 = vmatpush1.msra.mxu0 0.0
    %140 = vmatprep.subr.mxu0 0.0
    %141 = vmatpush1.msra.mxu0 0.0
    %142 = vmatprep.subr.mxu0 0.0
    %143 = vmatpush1.msra.mxu0 0.0
    %144 = vmatprep.subr.mxu0 0.0
    %145 = vmatpush1.msra.mxu0 0.0
    %146 = vmatprep.subr.mxu0 0.0
    %147 = vmatpush1.msra.mxu0 0.0
    %148 = vmatprep.mubr.f32.mxu0 0.0
    %149 = vmatmul.mubr.f32.gmra.mrb[0].mxu0 %v79
    %v150 = vpop.f32.mrb[0].mxu0
    %v151 = vadd.f32 0.0, %v150
    %v152 = vpop.f32.mrb[0].mxu0
    %153 = vmatprep.mubr.f32.mxu0 0.0
    %154 = vmatmul.mubr.f32.gmra.mrb[0].mxu0 %v82
    %v155 = vpop.f32.mrb[0].mxu0
    %v156 = vadd.f32 0.0, %v155
    %v157 = vpop.f32.mrb[0].mxu0
    %158 = vdwg.mxu0
    %v159 = vld [vmem:[#allocation3] sm:$0xff]
    %v160 = vld [vmem:[#allocation3 + $0x8] sm:$0xff]
    %v161 = vld [vmem:[#allocation3 + $0x10] sm:$0xff]
    %v162 = vld [vmem:[#allocation3 + $0x18] sm:$0xff]
    %v163 = vld [vmem:[#allocation3 + $0x20] sm:$0xff]
    %v164 = vld [vmem:[#allocation3 + $0x28] sm:$0xff]
    %v165 = vld [vmem:[#allocation3 + $0x30] sm:$0xff]
    %v166 = vld [vmem:[#allocation3 + $0x38] sm:$0xff]
    %v167 = vld [vmem:[#allocation3 + $0x40] sm:$0xff]
    %v168 = vld [vmem:[#allocation3 + $0x48] sm:$0xff]
    %v169 = vld [vmem:[#allocation3 + $0x50] sm:$0xff]
    %v170 = vld [vmem:[#allocation3 + $0x58] sm:$0xff]
    %v171 = vld [vmem:[#allocation3 + $0x60] sm:$0xff]
    %v172 = vld [vmem:[#allocation3 + $0x68] sm:$0xff]
    %v173 = vld [vmem:[#allocation3 + $0x70] sm:$0xff]
    %v174 = vld [vmem:[#allocation3 + $0x78] sm:$0xff]
    %175 = vmatprep.subr.mxu0 0.0
    %176 = vmatpush1.msra.mxu0 %v159
    %177 = vmatprep.subr.mxu0 0.0
    %178 = vmatpush1.msra.mxu0 %v160
    %179 = vmatprep.subr.mxu0 0.0
    %180 = vmatpush1.msra.mxu0 %v161
    %181 = vmatprep.subr.mxu0 0.0
    %182 = vmatpush1.msra.mxu0 %v162
    %183 = vmatprep.subr.mxu0 0.0
    %184 = vmatpush1.msra.mxu0 %v163
    %185 = vmatprep.subr.mxu0 0.0
    %186 = vmatpush1.msra.mxu0 %v164
    %187 = vmatprep.subr.mxu0 0.0
    %188 = vmatpush1.msra.mxu0 %v165
    %189 = vmatprep.subr.mxu0 0.0
    %190 = vmatpush1.msra.mxu0 %v166
    %191 = vmatprep.subr.mxu0 0.0
    %192 = vmatpush1.msra.mxu0 %v167
    %193 = vmatprep.subr.mxu0 0.0
    %194 = vmatpush1.msra.mxu0 %v168
    %195 = vmatprep.subr.mxu0 0.0
    %196 = vmatpush1.msra.mxu0 %v169
    %197 = vmatprep.subr.mxu0 0.0
    %198 = vmatpush1.msra.mxu0 %v170
    %199 = vmatprep.subr.mxu0 0.0
    %200 = vmatpush1.msra.mxu0 %v171
    %201 = vmatprep.subr.mxu0 0.0
    %202 = vmatpush1.msra.mxu0 %v172
    %203 = vmatprep.subr.mxu0 0.0
    %204 = vmatpush1.msra.mxu0 %v173
    %205 = vmatprep.subr.mxu0 0.0
    %206 = vmatpush1.msra.mxu0 %v174
    %207 = vmatprep.subr.mxu0 0.0
    %208 = vmatpush1.msra.mxu0 0.0
    %209 = vmatprep.subr.mxu0 0.0
    %210 = vmatpush1.msra.mxu0 0.0
    %211 = vmatprep.subr.mxu0 0.0
    %212 = vmatpush1.msra.mxu0 0.0
    %213 = vmatprep.subr.mxu0 0.0
    %214 = vmatpush1.msra.mxu0 0.0
    %215 = vmatprep.subr.mxu0 0.0
    %216 = vmatpush1.msra.mxu0 0.0
    %217 = vmatprep.subr.mxu0 0.0
    %218 = vmatpush1.msra.mxu0 0.0
    %219 = vmatprep.subr.mxu0 0.0
    %220 = vmatpush1.msra.mxu0 0.0
    %221 = vmatprep.subr.mxu0 0.0
    %222 = vmatpush1.msra.mxu0 0.0
    %223 = vmatprep.subr.mxu0 0.0
    %224 = vmatpush1.msra.mxu0 0.0
    %225 = vmatprep.subr.mxu0 0.0
    %226 = vmatpush1.msra.mxu0 0.0
    %227 = vmatprep.subr.mxu0 0.0
    %228 = vmatpush1.msra.mxu0 0.0
    %229 = vmatprep.subr.mxu0 0.0
    %230 = vmatpush1.msra.mxu0 0.0
    %231 = vmatprep.subr.mxu0 0.0
    %232 = vmatpush1.msra.mxu0 0.0
    %233 = vmatprep.subr.mxu0 0.0
    %234 = vmatpush1.msra.mxu0 0.0
    %235 = vmatprep.subr.mxu0 0.0
    %236 = vmatpush1.msra.mxu0 0.0
    %237 = vmatprep.subr.mxu0 0.0
    %238 = vmatpush1.msra.mxu0 0.0
    %239 = vmatprep.mubr.f32.mxu0 0.0
    %240 = vmatmul.mubr.f32.gmra.mrb[0].mxu0 %v151
    %v241 = vpop.f32.mrb[0].mxu0
    %v242 = vadd.f32 0.0, %v241
    %v243 = vpop.f32.mrb[0].mxu0
    %244 = vmatprep.mubr.f32.mxu0 0.0
    %245 = vmatmul.mubr.f32.gmra.mrb[0].mxu0 %v156
    %v246 = vpop.f32.mrb[0].mxu0
    %v247 = vadd.f32 0.0, %v246
    %v248 = vpop.f32.mrb[0].mxu0
    %249 = vdwg.mxu0
    %250 = vst [vmem:[#allocation2] sm:$0xff] %v242
    %251 = vst [vmem:[#allocation2 + $0x8] sm:$0xff] %v247
    %s252 = scalar_lea.vmem [#allocation3], 128
    %v253 = vld [vmem:[%s252] sm:$0xff]
    %v254 = vld [vmem:[%s252 + $0x8] sm:$0xff]
    %v255 = vld [vmem:[%s252 + $0x10] sm:$0xff]
    %v256 = vld [vmem:[%s252 + $0x18] sm:$0xff]
    %v257 = vld [vmem:[%s252 + $0x20] sm:$0xff]
    %v258 = vld [vmem:[%s252 + $0x28] sm:$0xff]
    %v259 = vld [vmem:[%s252 + $0x30] sm:$0xff]
    %v260 = vld [vmem:[%s252 + $0x38] sm:$0xff]
    %v261 = vld [vmem:[%s252 + $0x40] sm:$0xff]
    %v262 = vld [vmem:[%s252 + $0x48] sm:$0xff]
    %v263 = vld [vmem:[%s252 + $0x50] sm:$0xff]
    %v264 = vld [vmem:[%s252 + $0x58] sm:$0xff]
    %v265 = vld [vmem:[%s252 + $0x60] sm:$0xff]
    %v266 = vld [vmem:[%s252 + $0x68] sm:$0xff]
    %v267 = vld [vmem:[%s252 + $0x70] sm:$0xff]
    %v268 = vld [vmem:[%s252 + $0x78] sm:$0xff]
    %269 = vmatprep.subr.mxu0 0.0
    %270 = vmatpush1.msra.mxu0 %v253
    %271 = vmatprep.subr.mxu0 0.0
    %272 = vmatpush1.msra.mxu0 %v254
    %273 = vmatprep.subr.mxu0 0.0
    %274 = vmatpush1.msra.mxu0 %v255
    %275 = vmatprep.subr.mxu0 0.0
    %276 = vmatpush1.msra.mxu0 %v256
    %277 = vmatprep.subr.mxu0 0.0
    %278 = vmatpush1.msra.mxu0 %v257
    %279 = vmatprep.subr.mxu0 0.0
    %280 = vmatpush1.msra.mxu0 %v258
    %281 = vmatprep.subr.mxu0 0.0
    %282 = vmatpush1.msra.mxu0 %v259
    %283 = vmatprep.subr.mxu0 0.0
    %284 = vmatpush1.msra.mxu0 %v260
    %285 = vmatprep.subr.mxu0 0.0
    %286 = vmatpush1.msra.mxu0 %v261
    %287 = vmatprep.subr.mxu0 0.0
    %288 = vmatpush1.msra.mxu0 %v262
    %289 = vmatprep.subr.mxu0 0.0
    %290 = vmatpush1.msra.mxu0 %v263
    %291 = vmatprep.subr.mxu0 0.0
    %292 = vmatpush1.msra.mxu0 %v264
    %293 = vmatprep.subr.mxu0 0.0
    %294 = vmatpush1.msra.mxu0 %v265
    %295 = vmatprep.subr.mxu0 0.0
    %296 = vmatpush1.msra.mxu0 %v266
    %297 = vmatprep.subr.mxu0 0.0
    %298 = vmatpush1.msra.mxu0 %v267
    %299 = vmatprep.subr.mxu0 0.0
    %300 = vmatpush1.msra.mxu0 %v268
    %301 = vmatprep.subr.mxu0 0.0
    %302 = vmatpush1.msra.mxu0 0.0
    %303 = vmatprep.subr.mxu0 0.0
    %304 = vmatpush1.msra.mxu0 0.0
    %305 = vmatprep.subr.mxu0 0.0
    %306 = vmatpush1.msra.mxu0 0.0
    %307 = vmatprep.subr.mxu0 0.0
    %308 = vmatpush1.msra.mxu0 0.0
    %309 = vmatprep.subr.mxu0 0.0
    %310 = vmatpush1.msra.mxu0 0.0
    %311 = vmatprep.subr.mxu0 0.0
    %312 = vmatpush1.msra.mxu0 0.0
    %313 = vmatprep.subr.mxu0 0.0
    %314 = vmatpush1.msra.mxu0 0.0
    %315 = vmatprep.subr.mxu0 0.0
    %316 = vmatpush1.msra.mxu0 0.0
    %317 = vmatprep.subr.mxu0 0.0
    %318 = vmatpush1.msra.mxu0 0.0
    %319 = vmatprep.subr.mxu0 0.0
    %320 = vmatpush1.msra.mxu0 0.0
    %321 = vmatprep.subr.mxu0 0.0
    %322 = vmatpush1.msra.mxu0 0.0
    %323 = vmatprep.subr.mxu0 0.0
    %324 = vmatpush1.msra.mxu0 0.0
    %325 = vmatprep.subr.mxu0 0.0
    %326 = vmatpush1.msra.mxu0 0.0
    %327 = vmatprep.subr.mxu0 0.0
    %328 = vmatpush1.msra.mxu0 0.0
    %329 = vmatprep.subr.mxu0 0.0
    %330 = vmatpush1.msra.mxu0 0.0
    %331 = vmatprep.subr.mxu0 0.0
    %332 = vmatpush1.msra.mxu0 0.0
    %333 = vmatprep.mubr.f32.mxu0 0.0
    %334 = vmatmul.mubr.f32.gmra.mrb[0].mxu0 %v151
    %v335 = vpop.f32.mrb[0].mxu0
    %v336 = vadd.f32 0.0, %v335
    %v337 = vpop.f32.mrb[0].mxu0
    %338 = vmatprep.mubr.f32.mxu0 0.0
    %339 = vmatmul.mubr.f32.gmra.mrb[0].mxu0 %v156
    %v340 = vpop.f32.mrb[0].mxu0
    %v341 = vadd.f32 0.0, %v340
    %v342 = vpop.f32.mrb[0].mxu0
    %343 = vdwg.mxu0
    %344 = vst [vmem:[#allocation2 + $0x10] sm:$0xff] %v336
    %345 = vst [vmem:[#allocation2 + $0x18] sm:$0xff] %v341
    %s346 = scalar_lea.vmem [#allocation3], 256
    %v347 = vld [vmem:[%s346] sm:$0xff]
    %v348 = vld [vmem:[%s346 + $0x8] sm:$0xff]
    %v349 = vld [vmem:[%s346 + $0x10] sm:$0xff]
    %v350 = vld [vmem:[%s346 + $0x18] sm:$0xff]
    %v351 = vld [vmem:[%s346 + $0x20] sm:$0xff]
    %v352 = vld [vmem:[%s346 + $0x28] sm:$0xff]
    %v353 = vld [vmem:[%s346 + $0x30] sm:$0xff]
    %v354 = vld [vmem:[%s346 + $0x38] sm:$0xff]
    %v355 = vld [vmem:[%s346 + $0x40] sm:$0xff]
    %v356 = vld [vmem:[%s346 + $0x48] sm:$0xff]
    %v357 = vld [vmem:[%s346 + $0x50] sm:$0xff]
    %v358 = vld [vmem:[%s346 + $0x58] sm:$0xff]
    %v359 = vld [vmem:[%s346 + $0x60] sm:$0xff]
    %v360 = vld [vmem:[%s346 + $0x68] sm:$0xff]
    %v361 = vld [vmem:[%s346 + $0x70] sm:$0xff]
    %v362 = vld [vmem:[%s346 + $0x78] sm:$0xff]
    %363 = vmatprep.subr.mxu0 0.0
    %364 = vmatpush1.msra.mxu0 %v347
    %365 = vmatprep.subr.mxu0 0.0
    %366 = vmatpush1.msra.mxu0 %v348
    %367 = vmatprep.subr.mxu0 0.0
    %368 = vmatpush1.msra.mxu0 %v349
    %369 = vmatprep.subr.mxu0 0.0
    %370 = vmatpush1.msra.mxu0 %v350
    %371 = vmatprep.subr.mxu0 0.0
    %372 = vmatpush1.msra.mxu0 %v351
    %373 = vmatprep.subr.mxu0 0.0
    %374 = vmatpush1.msra.mxu0 %v352
    %375 = vmatprep.subr.mxu0 0.0
    %376 = vmatpush1.msra.mxu0 %v353
    %377 = vmatprep.subr.mxu0 0.0
    %378 = vmatpush1.msra.mxu0 %v354
    %379 = vmatprep.subr.mxu0 0.0
    %380 = vmatpush1.msra.mxu0 %v355
    %381 = vmatprep.subr.mxu0 0.0
    %382 = vmatpush1.msra.mxu0 %v356
    %383 = vmatprep.subr.mxu0 0.0
    %384 = vmatpush1.msra.mxu0 %v357
    %385 = vmatprep.subr.mxu0 0.0
    %386 = vmatpush1.msra.mxu0 %v358
    %387 = vmatprep.subr.mxu0 0.0
    %388 = vmatpush1.msra.mxu0 %v359
    %389 = vmatprep.subr.mxu0 0.0
    %390 = vmatpush1.msra.mxu0 %v360
    %391 = vmatprep.subr.mxu0 0.0
    %392 = vmatpush1.msra.mxu0 %v361
    %393 = vmatprep.subr.mxu0 0.0
    %394 = vmatpush1.msra.mxu0 %v362
    %395 = vmatprep.subr.mxu0 0.0
    %396 = vmatpush1.msra.mxu0 0.0
    %397 = vmatprep.subr.mxu0 0.0
    %398 = vmatpush1.msra.mxu0 0.0
    %399 = vmatprep.subr.mxu0 0.0
    %400 = vmatpush1.msra.mxu0 0.0
    %401 = vmatprep.subr.mxu0 0.0
    %402 = vmatpush1.msra.mxu0 0.0
    %403 = vmatprep.subr.mxu0 0.0
    %404 = vmatpush1.msra.mxu0 0.0
    %405 = vmatprep.subr.mxu0 0.0
    %406 = vmatpush1.msra.mxu0 0.0
    %407 = vmatprep.subr.mxu0 0.0
    %408 = vmatpush1.msra.mxu0 0.0
    %409 = vmatprep.subr.mxu0 0.0
    %410 = vmatpush1.msra.mxu0 0.0
    %411 = vmatprep.subr.mxu0 0.0
    %412 = vmatpush1.msra.mxu0 0.0
    %413 = vmatprep.subr.mxu0 0.0
    %414 = vmatpush1.msra.mxu0 0.0
    %415 = vmatprep.subr.mxu0 0.0
    %416 = vmatpush1.msra.mxu0 0.0
    %417 = vmatprep.subr.mxu0 0.0
    %418 = vmatpush1.msra.mxu0 0.0
    %419 = vmatprep.subr.mxu0 0.0
    %420 = vmatpush1.msra.mxu0 0.0
    %421 = vmatprep.subr.mxu0 0.0
    %422 = vmatpush1.msra.mxu0 0.0
    %423 = vmatprep.subr.mxu0 0.0
    %424 = vmatpush1.msra.mxu0 0.0
    %425 = vmatprep.subr.mxu0 0.0
    %426 = vmatpush1.msra.mxu0 0.0
    %427 = vmatprep.mubr.f32.mxu0 0.0
    %428 = vmatmul.mubr.f32.gmra.mrb[0].mxu0 %v151
    %v429 = vpop.f32.mrb[0].mxu0
    %v430 = vadd.f32 0.0, %v429
    %v431 = vpop.f32.mrb[0].mxu0
    %432 = vmatprep.mubr.f32.mxu0 0.0
    %433 = vmatmul.mubr.f32.gmra.mrb[0].mxu0 %v156
    %v434 = vpop.f32.mrb[0].mxu0
    %v435 = vadd.f32 0.0, %v434
    %v436 = vpop.f32.mrb[0].mxu0
    %437 = vdwg.mxu0
    %438 = vst [vmem:[#allocation2 + $0x20] sm:$0xff] %v430
    %439 = vst [vmem:[#allocation2 + $0x28] sm:$0xff] %v435
    %s440 = scalar_lea.vmem [#allocation3], 384
    %v441 = vld [vmem:[%s440] sm:$0xff]
    %v442 = vld [vmem:[%s440 + $0x8] sm:$0xff]
    %v443 = vld [vmem:[%s440 + $0x10] sm:$0xff]
    %v444 = vld [vmem:[%s440 + $0x18] sm:$0xff]
    %v445 = vld [vmem:[%s440 + $0x20] sm:$0xff]
    %v446 = vld [vmem:[%s440 + $0x28] sm:$0xff]
    %v447 = vld [vmem:[%s440 + $0x30] sm:$0xff]
    %v448 = vld [vmem:[%s440 + $0x38] sm:$0xff]
    %v449 = vld [vmem:[%s440 + $0x40] sm:$0xff]
    %v450 = vld [vmem:[%s440 + $0x48] sm:$0xff]
    %v451 = vld [vmem:[%s440 + $0x50] sm:$0xff]
    %v452 = vld [vmem:[%s440 + $0x58] sm:$0xff]
    %v453 = vld [vmem:[%s440 + $0x60] sm:$0xff]
    %v454 = vld [vmem:[%s440 + $0x68] sm:$0xff]
    %v455 = vld [vmem:[%s440 + $0x70] sm:$0xff]
    %v456 = vld [vmem:[%s440 + $0x78] sm:$0xff]
    %457 = vmatprep.subr.mxu0 0.0
    %458 = vmatpush1.msra.mxu0 %v441
    %459 = vmatprep.subr.mxu0 0.0
    %460 = vmatpush1.msra.mxu0 %v442
    %461 = vmatprep.subr.mxu0 0.0
    %462 = vmatpush1.msra.mxu0 %v443
    %463 = vmatprep.subr.mxu0 0.0
    %464 = vmatpush1.msra.mxu0 %v444
    %465 = vmatprep.subr.mxu0 0.0
    %466 = vmatpush1.msra.mxu0 %v445
    %467 = vmatprep.subr.mxu0 0.0
    %468 = vmatpush1.msra.mxu0 %v446
    %469 = vmatprep.subr.mxu0 0.0
    %470 = vmatpush1.msra.mxu0 %v447
    %471 = vmatprep.subr.mxu0 0.0
    %472 = vmatpush1.msra.mxu0 %v448
    %473 = vmatprep.subr.mxu0 0.0
    %474 = vmatpush1.msra.mxu0 %v449
    %475 = vmatprep.subr.mxu0 0.0
    %476 = vmatpush1.msra.mxu0 %v450
    %477 = vmatprep.subr.mxu0 0.0
    %478 = vmatpush1.msra.mxu0 %v451
    %479 = vmatprep.subr.mxu0 0.0
    %480 = vmatpush1.msra.mxu0 %v452
    %481 = vmatprep.subr.mxu0 0.0
    %482 = vmatpush1.msra.mxu0 %v453
    %483 = vmatprep.subr.mxu0 0.0
    %484 = vmatpush1.msra.mxu0 %v454
    %485 = vmatprep.subr.mxu0 0.0
    %486 = vmatpush1.msra.mxu0 %v455
    %487 = vmatprep.subr.mxu0 0.0
    %488 = vmatpush1.msra.mxu0 %v456
    %489 = vmatprep.subr.mxu0 0.0
    %490 = vmatpush1.msra.mxu0 0.0
    %491 = vmatprep.subr.mxu0 0.0
    %492 = vmatpush1.msra.mxu0 0.0
    %493 = vmatprep.subr.mxu0 0.0
    %494 = vmatpush1.msra.mxu0 0.0
    %495 = vmatprep.subr.mxu0 0.0
    %496 = vmatpush1.msra.mxu0 0.0
    %497 = vmatprep.subr.mxu0 0.0
    %498 = vmatpush1.msra.mxu0 0.0
    %499 = vmatprep.subr.mxu0 0.0
    %500 = vmatpush1.msra.mxu0 0.0
    %501 = vmatprep.subr.mxu0 0.0
    %502 = vmatpush1.msra.mxu0 0.0
    %503 = vmatprep.subr.mxu0 0.0
    %504 = vmatpush1.msra.mxu0 0.0
    %505 = vmatprep.subr.mxu0 0.0
    %506 = vmatpush1.msra.mxu0 0.0
    %507 = vmatprep.subr.mxu0 0.0
    %508 = vmatpush1.msra.mxu0 0.0
    %509 = vmatprep.subr.mxu0 0.0
    %510 = vmatpush1.msra.mxu0 0.0
    %511 = vmatprep.subr.mxu0 0.0
    %512 = vmatpush1.msra.mxu0 0.0
    %513 = vmatprep.subr.mxu0 0.0
    %514 = vmatpush1.msra.mxu0 0.0
    %515 = vmatprep.subr.mxu0 0.0
    %516 = vmatpush1.msra.mxu0 0.0
    %517 = vmatprep.subr.mxu0 0.0
    %518 = vmatpush1.msra.mxu0 0.0
    %519 = vmatprep.subr.mxu0 0.0
    %520 = vmatpush1.msra.mxu0 0.0
    %521 = vmatprep.mubr.f32.mxu0 0.0
    %522 = vmatmul.mubr.f32.gmra.mrb[0].mxu0 %v151
    %v523 = vpop.f32.mrb[0].mxu0
    %v524 = vadd.f32 0.0, %v523
    %v525 = vpop.f32.mrb[0].mxu0
    %526 = vmatprep.mubr.f32.mxu0 0.0
    %527 = vmatmul.mubr.f32.gmra.mrb[0].mxu0 %v156
    %v528 = vpop.f32.mrb[0].mxu0
    %v529 = vadd.f32 0.0, %v528
    %v530 = vpop.f32.mrb[0].mxu0
    %531 = vdwg.mxu0
    %532 = vst [vmem:[#allocation2 + $0x30] sm:$0xff] %v524
    %533 = vst [vmem:[#allocation2 + $0x38] sm:$0xff] %v529
    %s534 = scalar_lea.vmem [#allocation3], 512
    %v535 = vld [vmem:[%s534] sm:$0xff]
    %v536 = vld [vmem:[%s534 + $0x8] sm:$0xff]
    %v537 = vld [vmem:[%s534 + $0x10] sm:$0xff]
    %v538 = vld [vmem:[%s534 + $0x18] sm:$0xff]
    %v539 = vld [vmem:[%s534 + $0x20] sm:$0xff]
    %v540 = vld [vmem:[%s534 + $0x28] sm:$0xff]
    %v541 = vld [vmem:[%s534 + $0x30] sm:$0xff]
    %v542 = vld [vmem:[%s534 + $0x38] sm:$0xff]
    %v543 = vld [vmem:[%s534 + $0x40] sm:$0xff]
    %v544 = vld [vmem:[%s534 + $0x48] sm:$0xff]
    %v545 = vld [vmem:[%s534 + $0x50] sm:$0xff]
    %v546 = vld [vmem:[%s534 + $0x58] sm:$0xff]
    %v547 = vld [vmem:[%s534 + $0x60] sm:$0xff]
    %v548 = vld [vmem:[%s534 + $0x68] sm:$0xff]
    %v549 = vld [vmem:[%s534 + $0x70] sm:$0xff]
    %v550 = vld [vmem:[%s534 + $0x78] sm:$0xff]
    %551 = vmatprep.subr.mxu0 0.0
    %552 = vmatpush1.msra.mxu0 %v535
    %553 = vmatprep.subr.mxu0 0.0
    %554 = vmatpush1.msra.mxu0 %v536
    %555 = vmatprep.subr.mxu0 0.0
    %556 = vmatpush1.msra.mxu0 %v537
    %557 = vmatprep.subr.mxu0 0.0
    %558 = vmatpush1.msra.mxu0 %v538
    %559 = vmatprep.subr.mxu0 0.0
    %560 = vmatpush1.msra.mxu0 %v539
    %561 = vmatprep.subr.mxu0 0.0
    %562 = vmatpush1.msra.mxu0 %v540
    %563 = vmatprep.subr.mxu0 0.0
    %564 = vmatpush1.msra.mxu0 %v541
    %565 = vmatprep.subr.mxu0 0.0
    %566 = vmatpush1.msra.mxu0 %v542
    %567 = vmatprep.subr.mxu0 0.0
    %568 = vmatpush1.msra.mxu0 %v543
    %569 = vmatprep.subr.mxu0 0.0
    %570 = vmatpush1.msra.mxu0 %v544
    %571 = vmatprep.subr.mxu0 0.0
    %572 = vmatpush1.msra.mxu0 %v545
    %573 = vmatprep.subr.mxu0 0.0
    %574 = vmatpush1.msra.mxu0 %v546
    %575 = vmatprep.subr.mxu0 0.0
    %576 = vmatpush1.msra.mxu0 %v547
    %577 = vmatprep.subr.mxu0 0.0
    %578 = vmatpush1.msra.mxu0 %v548
    %579 = vmatprep.subr.mxu0 0.0
    %580 = vmatpush1.msra.mxu0 %v549
    %581 = vmatprep.subr.mxu0 0.0
    %582 = vmatpush1.msra.mxu0 %v550
    %583 = vmatprep.subr.mxu0 0.0
    %584 = vmatpush1.msra.mxu0 0.0
    %585 = vmatprep.subr.mxu0 0.0
    %586 = vmatpush1.msra.mxu0 0.0
    %587 = vmatprep.subr.mxu0 0.0
    %588 = vmatpush1.msra.mxu0 0.0
    %589 = vmatprep.subr.mxu0 0.0
    %590 = vmatpush1.msra.mxu0 0.0
    %591 = vmatprep.subr.mxu0 0.0
    %592 = vmatpush1.msra.mxu0 0.0
    %593 = vmatprep.subr.mxu0 0.0
    %594 = vmatpush1.msra.mxu0 0.0
    %595 = vmatprep.subr.mxu0 0.0
    %596 = vmatpush1.msra.mxu0 0.0
    %597 = vmatprep.subr.mxu0 0.0
    %598 = vmatpush1.msra.mxu0 0.0
    %599 = vmatprep.subr.mxu0 0.0
    %600 = vmatpush1.msra.mxu0 0.0
    %601 = vmatprep.subr.mxu0 0.0
    %602 = vmatpush1.msra.mxu0 0.0
    %603 = vmatprep.subr.mxu0 0.0
    %604 = vmatpush1.msra.mxu0 0.0
    %605 = vmatprep.subr.mxu0 0.0
    %606 = vmatpush1.msra.mxu0 0.0
    %607 = vmatprep.subr.mxu0 0.0
    %608 = vmatpush1.msra.mxu0 0.0
    %609 = vmatprep.subr.mxu0 0.0
    %610 = vmatpush1.msra.mxu0 0.0
    %611 = vmatprep.subr.mxu0 0.0
    %612 = vmatpush1.msra.mxu0 0.0
    %613 = vmatprep.subr.mxu0 0.0
    %614 = vmatpush1.msra.mxu0 0.0
    %615 = vmatprep.mubr.f32.mxu0 0.0
    %616 = vmatmul.mubr.f32.gmra.mrb[0].mxu0 %v151
    %v617 = vpop.f32.mrb[0].mxu0
    %v618 = vadd.f32 0.0, %v617
    %v619 = vpop.f32.mrb[0].mxu0
    %620 = vmatprep.mubr.f32.mxu0 0.0
    %621 = vmatmul.mubr.f32.gmra.mrb[0].mxu0 %v156
    %v622 = vpop.f32.mrb[0].mxu0
    %v623 = vadd.f32 0.0, %v622
    %v624 = vpop.f32.mrb[0].mxu0
    %625 = vdwg.mxu0
    %626 = vst [vmem:[#allocation2 + $0x40] sm:$0xff] %v618
    %627 = vst [vmem:[#allocation2 + $0x48] sm:$0xff] %v623
    %s628 = scalar_lea.vmem [#allocation3], 640
    %v629 = vld [vmem:[%s628] sm:$0xff]
    %v630 = vld [vmem:[%s628 + $0x8] sm:$0xff]
    %v631 = vld [vmem:[%s628 + $0x10] sm:$0xff]
    %v632 = vld [vmem:[%s628 + $0x18] sm:$0xff]
    %v633 = vld [vmem:[%s628 + $0x20] sm:$0xff]
    %v634 = vld [vmem:[%s628 + $0x28] sm:$0xff]
    %v635 = vld [vmem:[%s628 + $0x30] sm:$0xff]
    %v636 = vld [vmem:[%s628 + $0x38] sm:$0xff]
    %v637 = vld [vmem:[%s628 + $0x40] sm:$0xff]
    %v638 = vld [vmem:[%s628 + $0x48] sm:$0xff]
    %v639 = vld [vmem:[%s628 + $0x50] sm:$0xff]
    %v640 = vld [vmem:[%s628 + $0x58] sm:$0xff]
    %v641 = vld [vmem:[%s628 + $0x60] sm:$0xff]
    %v642 = vld [vmem:[%s628 + $0x68] sm:$0xff]
    %v643 = vld [vmem:[%s628 + $0x70] sm:$0xff]
    %v644 = vld [vmem:[%s628 + $0x78] sm:$0xff]
    %645 = vmatprep.subr.mxu0 0.0
    %646 = vmatpush1.msra.mxu0 %v629
    %647 = vmatprep.subr.mxu0 0.0
    %648 = vmatpush1.msra.mxu0 %v630
    %649 = vmatprep.subr.mxu0 0.0
    %650 = vmatpush1.msra.mxu0 %v631
    %651 = vmatprep.subr.mxu0 0.0
    %652 = vmatpush1.msra.mxu0 %v632
    %653 = vmatprep.subr.mxu0 0.0
    %654 = vmatpush1.msra.mxu0 %v633
    %655 = vmatprep.subr.mxu0 0.0
    %656 = vmatpush1.msra.mxu0 %v634
    %657 = vmatprep.subr.mxu0 0.0
    %658 = vmatpush1.msra.mxu0 %v635
    %659 = vmatprep.subr.mxu0 0.0
    %660 = vmatpush1.msra.mxu0 %v636
    %661 = vmatprep.subr.mxu0 0.0
    %662 = vmatpush1.msra.mxu0 %v637
    %663 = vmatprep.subr.mxu0 0.0
    %664 = vmatpush1.msra.mxu0 %v638
    %665 = vmatprep.subr.mxu0 0.0
    %666 = vmatpush1.msra.mxu0 %v639
    %667 = vmatprep.subr.mxu0 0.0
    %668 = vmatpush1.msra.mxu0 %v640
    %669 = vmatprep.subr.mxu0 0.0
    %670 = vmatpush1.msra.mxu0 %v641
    %671 = vmatprep.subr.mxu0 0.0
    %672 = vmatpush1.msra.mxu0 %v642
    %673 = vmatprep.subr.mxu0 0.0
    %674 = vmatpush1.msra.mxu0 %v643
    %675 = vmatprep.subr.mxu0 0.0
    %676 = vmatpush1.msra.mxu0 %v644
    %677 = vmatprep.subr.mxu0 0.0
    %678 = vmatpush1.msra.mxu0 0.0
    %679 = vmatprep.subr.mxu0 0.0
    %680 = vmatpush1.msra.mxu0 0.0
    %681 = vmatprep.subr.mxu0 0.0
    %682 = vmatpush1.msra.mxu0 0.0
    %683 = vmatprep.subr.mxu0 0.0
    %684 = vmatpush1.msra.mxu0 0.0
    %685 = vmatprep.subr.mxu0 0.0
    %686 = vmatpush1.msra.mxu0 0.0
    %687 = vmatprep.subr.mxu0 0.0
    %688 = vmatpush1.msra.mxu0 0.0
    %689 = vmatprep.subr.mxu0 0.0
    %690 = vmatpush1.msra.mxu0 0.0
    %691 = vmatprep.subr.mxu0 0.0
    %692 = vmatpush1.msra.mxu0 0.0
    %693 = vmatprep.subr.mxu0 0.0
    %694 = vmatpush1.msra.mxu0 0.0
    %695 = vmatprep.subr.mxu0 0.0
    %696 = vmatpush1.msra.mxu0 0.0
    %697 = vmatprep.subr.mxu0 0.0
    %698 = vmatpush1.msra.mxu0 0.0
    %699 = vmatprep.subr.mxu0 0.0
    %700 = vmatpush1.msra.mxu0 0.0
    %701 = vmatprep.subr.mxu0 0.0
    %702 = vmatpush1.msra.mxu0 0.0
    %703 = vmatprep.subr.mxu0 0.0
    %704 = vmatpush1.msra.mxu0 0.0
    %705 = vmatprep.subr.mxu0 0.0
    %706 = vmatpush1.msra.mxu0 0.0
    %707 = vmatprep.subr.mxu0 0.0
    %708 = vmatpush1.msra.mxu0 0.0
    %709 = vmatprep.mubr.f32.mxu0 0.0
    %710 = vmatmul.mubr.f32.gmra.mrb[0].mxu0 %v151
    %v711 = vpop.f32.mrb[0].mxu0
    %v712 = vadd.f32 0.0, %v711
    %v713 = vpop.f32.mrb[0].mxu0
    %714 = vmatprep.mubr.f32.mxu0 0.0
    %715 = vmatmul.mubr.f32.gmra.mrb[0].mxu0 %v156
    %v716 = vpop.f32.mrb[0].mxu0
    %v717 = vadd.f32 0.0, %v716
    %v718 = vpop.f32.mrb[0].mxu0
    %719 = vdwg.mxu0
    %720 = vst [vmem:[#allocation2 + $0x50] sm:$0xff] %v712
    %721 = vst [vmem:[#allocation2 + $0x58] sm:$0xff] %v717
    %v722 = vld [vmem:[%s4] sm:$0xff]
    %v723 = vld [vmem:[#allocation2] sm:$0xff]
    %v724 = vld [vmem:[#allocation2 + $0x8] sm:$0xff]
    %v725 = vld [vmem:[#allocation2 + $0x10] sm:$0xff]
    %v726 = vld [vmem:[#allocation2 + $0x18] sm:$0xff]
    %v727 = vld [vmem:[#allocation2 + $0x20] sm:$0xff]
    %v728 = vld [vmem:[#allocation2 + $0x28] sm:$0xff]
    %v729 = vld [vmem:[#allocation2 + $0x30] sm:$0xff]
    %v730 = vld [vmem:[#allocation2 + $0x38] sm:$0xff]
    %v731 = vld [vmem:[#allocation2 + $0x40] sm:$0xff]
    %v732 = vld [vmem:[#allocation2 + $0x48] sm:$0xff]
    %v733 = vld [vmem:[#allocation2 + $0x50] sm:$0xff]
    %v734 = vld [vmem:[#allocation2 + $0x58] sm:$0xff]
    %vm735 = vcmask 785408
    %v737 = vsel %vm735, %v722, 0
    %739 = vmatprep.subr.mxu0 0.0
    %740 = vmatpush1.msra.mxu0 %v723
    %741 = vmatprep.subr.mxu0 0.0
    %742 = vmatpush1.msra.mxu0 %v724
    %743 = vmatprep.subr.mxu0 0.0
    %744 = vmatpush1.msra.mxu0 %v725
    %745 = vmatprep.subr.mxu0 0.0
    %746 = vmatpush1.msra.mxu0 %v726
    %747 = vmatprep.subr.mxu0 0.0
    %748 = vmatpush1.msra.mxu0 %v727
    %749 = vmatprep.subr.mxu0 0.0
    %750 = vmatpush1.msra.mxu0 %v728
    %751 = vmatprep.subr.mxu0 0.0
    %752 = vmatpush1.msra.mxu0 %v729
    %753 = vmatprep.subr.mxu0 0.0
    %754 = vmatpush1.msra.mxu0 %v730
    %755 = vmatprep.subr.mxu0 0.0
    %756 = vmatpush1.msra.mxu0 %v731
    %757 = vmatprep.subr.mxu0 0.0
    %758 = vmatpush1.msra.mxu0 %v732
    %759 = vmatprep.subr.mxu0 0.0
    %760 = vmatpush1.msra.mxu0 %v733
    %761 = vmatprep.subr.mxu0 0.0
    %762 = vmatpush1.msra.mxu0 %v734
    %763 = vmatprep.subr.mxu0 0.0
    %764 = vmatpush1.msra.mxu0 0.0
    %765 = vmatprep.subr.mxu0 0.0
    %766 = vmatpush1.msra.mxu0 0.0
    %767 = vmatprep.subr.mxu0 0.0
    %768 = vmatpush1.msra.mxu0 0.0
    %769 = vmatprep.subr.mxu0 0.0
    %770 = vmatpush1.msra.mxu0 0.0
    %771 = vmatprep.subr.mxu0 0.0
    %772 = vmatpush1.msra.mxu0 0.0
    %773 = vmatprep.subr.mxu0 0.0
    %774 = vmatpush1.msra.mxu0 0.0
    %775 = vmatprep.subr.mxu0 0.0
    %776 = vmatpush1.msra.mxu0 0.0
    %777 = vmatprep.subr.mxu0 0.0
    %778 = vmatpush1.msra.mxu0 0.0
    %779 = vmatprep.subr.mxu0 0.0
    %780 = vmatpush1.msra.mxu0 0.0
    %781 = vmatprep.subr.mxu0 0.0
    %782 = vmatpush1.msra.mxu0 0.0
    %783 = vmatprep.subr.mxu0 0.0
    %784 = vmatpush1.msra.mxu0 0.0
    %785 = vmatprep.subr.mxu0 0.0
    %786 = vmatpush1.msra.mxu0 0.0
    %787 = vmatprep.subr.mxu0 0.0
    %788 = vmatpush1.msra.mxu0 0.0
    %789 = vmatprep.subr.mxu0 0.0
    %790 = vmatpush1.msra.mxu0 0.0
    %791 = vmatprep.subr.mxu0 0.0
    %792 = vmatpush1.msra.mxu0 0.0
    %793 = vmatprep.subr.mxu0 0.0
    %794 = vmatpush1.msra.mxu0 0.0
    %795 = vmatprep.subr.mxu0 0.0
    %796 = vmatpush1.msra.mxu0 0.0
    %797 = vmatprep.subr.mxu0 0.0
    %798 = vmatpush1.msra.mxu0 0.0
    %799 = vmatprep.subr.mxu0 0.0
    %800 = vmatpush1.msra.mxu0 0.0
    %801 = vmatprep.subr.mxu0 0.0
    %802 = vmatpush1.msra.mxu0 0.0
    %803 = vmatprep.mubr.f32.mxu0 0.0
    %804 = vmatmul.mubr.f32.gmra.mrb[0].mxu0 %v737
    %v805 = vpop.f32.mrb[0].mxu0
    %v806 = vadd.f32 0.0, %v805
    %v807 = vpop.f32.mrb[0].mxu0
    %808 = vdwg.mxu0
    %v809 = vmax.f32 %v806, 0.0
    %v810 = vld [vmem:[%s6] sm:$0xff]
    %v811 = vld [vmem:[%s6 + $0x8] sm:$0xff]
    %v813 = vsel %vm77, %v810, 0
    %v816 = vsel %vm77, %v811, 0
    %818 = vmatprep.subr.mxu0 0.0
    %819 = vmatpush1.msra.mxu0 %v809
    %820 = vmatprep.subr.mxu0 0.0
    %821 = vmatpush1.msra.mxu0 0.0
    %822 = vmatprep.subr.mxu0 0.0
    %823 = vmatpush1.msra.mxu0 0.0
    %824 = vmatprep.subr.mxu0 0.0
    %825 = vmatpush1.msra.mxu0 0.0
    %826 = vmatprep.subr.mxu0 0.0
    %827 = vmatpush1.msra.mxu0 0.0
    %828 = vmatprep.subr.mxu0 0.0
    %829 = vmatpush1.msra.mxu0 0.0
    %830 = vmatprep.subr.mxu0 0.0
    %831 = vmatpush1.msra.mxu0 0.0
    %832 = vmatprep.subr.mxu0 0.0
    %833 = vmatpush1.msra.mxu0 0.0
    %834 = vmatprep.subr.mxu0 0.0
    %835 = vmatpush1.msra.mxu0 0.0
    %836 = vmatprep.subr.mxu0 0.0
    %837 = vmatpush1.msra.mxu0 0.0
    %838 = vmatprep.subr.mxu0 0.0
    %839 = vmatpush1.msra.mxu0 0.0
    %840 = vmatprep.subr.mxu0 0.0
    %841 = vmatpush1.msra.mxu0 0.0
    %842 = vmatprep.subr.mxu0 0.0
    %843 = vmatpush1.msra.mxu0 0.0
    %844 = vmatprep.subr.mxu0 0.0
    %845 = vmatpush1.msra.mxu0 0.0
    %846 = vmatprep.subr.mxu0 0.0
    %847 = vmatpush1.msra.mxu0 0.0
    %848 = vmatprep.subr.mxu0 0.0
    %849 = vmatpush1.msra.mxu0 0.0
    %850 = vmatprep.subr.mxu0 0.0
    %851 = vmatpush1.msra.mxu0 0.0
    %852 = vmatprep.subr.mxu0 0.0
    %853 = vmatpush1.msra.mxu0 0.0
    %854 = vmatprep.subr.mxu0 0.0
    %855 = vmatpush1.msra.mxu0 0.0
    %856 = vmatprep.subr.mxu0 0.0
    %857 = vmatpush1.msra.mxu0 0.0
    %858 = vmatprep.subr.mxu0 0.0
    %859 = vmatpush1.msra.mxu0 0.0
    %860 = vmatprep.subr.mxu0 0.0
    %861 = vmatpush1.msra.mxu0 0.0
    %862 = vmatprep.subr.mxu0 0.0
    %863 = vmatpush1.msra.mxu0 0.0
    %864 = vmatprep.subr.mxu0 0.0
    %865 = vmatpush1.msra.mxu0 0.0
    %866 = vmatprep.subr.mxu0 0.0
    %867 = vmatpush1.msra.mxu0 0.0
    %868 = vmatprep.subr.mxu0 0.0
    %869 = vmatpush1.msra.mxu0 0.0
    %870 = vmatprep.subr.mxu0 0.0
    %871 = vmatpush1.msra.mxu0 0.0
    %872 = vmatprep.subr.mxu0 0.0
    %873 = vmatpush1.msra.mxu0 0.0
    %874 = vmatprep.subr.mxu0 0.0
    %875 = vmatpush1.msra.mxu0 0.0
    %876 = vmatprep.subr.mxu0 0.0
    %877 = vmatpush1.msra.mxu0 0.0
    %878 = vmatprep.subr.mxu0 0.0
    %879 = vmatpush1.msra.mxu0 0.0
    %880 = vmatprep.subr.mxu0 0.0
    %881 = vmatpush1.msra.mxu0 0.0
    %882 = vmatprep.mubr.f32.mxu0 0.0
    %883 = vmatmul.mubr.f32.gmra.mrb[0].mxu0 %v813
    %v884 = vpop.f32.mrb[0].mxu0
    %v885 = vadd.f32 0.0, %v884
    %v886 = vpop.f32.mrb[0].mxu0
    %887 = vmatprep.mubr.f32.mxu0 0.0
    %888 = vmatmul.mubr.f32.gmra.mrb[0].mxu0 %v816
    %v889 = vpop.f32.mrb[0].mxu0
    %v890 = vadd.f32 0.0, %v889
    %v891 = vpop.f32.mrb[0].mxu0
    %892 = vdwg.mxu0
    %v893 = vadd.f32 %v151, %v885
    %v894 = vadd.f32 %v156, %v890
    %v895 = vld [vmem:[%s7] sm:$0xff]
    %v896 = vld [vmem:[#allocation6] sm:$0xff]
    %v897 = vld [vmem:[#allocation6 + $0x8] sm:$0xff]
    %v898 = vld [vmem:[#allocation6 + $0x10] sm:$0xff]
    %v899 = vld [vmem:[#allocation6 + $0x18] sm:$0xff]
    %v900 = vld [vmem:[#allocation6 + $0x20] sm:$0xff]
    %v901 = vld [vmem:[#allocation6 + $0x28] sm:$0xff]
    %v902 = vld [vmem:[#allocation6 + $0x30] sm:$0xff]
    %v903 = vld [vmem:[#allocation6 + $0x38] sm:$0xff]
    %v904 = vld [vmem:[#allocation6 + $0x40] sm:$0xff]
    %v905 = vld [vmem:[#allocation6 + $0x48] sm:$0xff]
    %v906 = vld [vmem:[#allocation6 + $0x50] sm:$0xff]
    %v907 = vld [vmem:[#allocation6 + $0x58] sm:$0xff]
    %v908 = vld [vmem:[#allocation6 + $0x60] sm:$0xff]
    %v909 = vld [vmem:[#allocation6 + $0x68] sm:$0xff]
    %v910 = vld [vmem:[#allocation6 + $0x70] sm:$0xff]
    %v911 = vld [vmem:[#allocation6 + $0x78] sm:$0xff]
    %912 = vmatprep.subr.mxu0 0.0
    %913 = vmatpush1.msra.mxu0 %v896
    %914 = vmatprep.subr.mxu0 0.0
    %915 = vmatpush1.msra.mxu0 %v897
    %916 = vmatprep.subr.mxu0 0.0
    %917 = vmatpush1.msra.mxu0 %v898
    %918 = vmatprep.subr.mxu0 0.0
    %919 = vmatpush1.msra.mxu0 %v899
    %920 = vmatprep.subr.mxu0 0.0
    %921 = vmatpush1.msra.mxu0 %v900
    %922 = vmatprep.subr.mxu0 0.0
    %923 = vmatpush1.msra.mxu0 %v901
    %924 = vmatprep.subr.mxu0 0.0
    %925 = vmatpush1.msra.mxu0 %v902
    %926 = vmatprep.subr.mxu0 0.0
    %927 = vmatpush1.msra.mxu0 %v903
    %928 = vmatprep.subr.mxu0 0.0
    %929 = vmatpush1.msra.mxu0 %v904
    %930 = vmatprep.subr.mxu0 0.0
    %931 = vmatpush1.msra.mxu0 %v905
    %932 = vmatprep.subr.mxu0 0.0
    %933 = vmatpush1.msra.mxu0 %v906
    %934 = vmatprep.subr.mxu0 0.0
    %935 = vmatpush1.msra.mxu0 %v907
    %936 = vmatprep.subr.mxu0 0.0
    %937 = vmatpush1.msra.mxu0 %v908
    %938 = vmatprep.subr.mxu0 0.0
    %939 = vmatpush1.msra.mxu0 %v909
    %940 = vmatprep.subr.mxu0 0.0
    %941 = vmatpush1.msra.mxu0 %v910
    %942 = vmatprep.subr.mxu0 0.0
    %943 = vmatpush1.msra.mxu0 %v911
    %944 = vmatprep.subr.mxu0 0.0
    %945 = vmatpush1.msra.mxu0 0.0
    %946 = vmatprep.subr.mxu0 0.0
    %947 = vmatpush1.msra.mxu0 0.0
    %948 = vmatprep.subr.mxu0 0.0
    %949 = vmatpush1.msra.mxu0 0.0
    %950 = vmatprep.subr.mxu0 0.0
    %951 = vmatpush1.msra.mxu0 0.0
    %952 = vmatprep.subr.mxu0 0.0
    %953 = vmatpush1.msra.mxu0 0.0
    %954 = vmatprep.subr.mxu0 0.0
    %955 = vmatpush1.msra.mxu0 0.0
    %956 = vmatprep.subr.mxu0 0.0
    %957 = vmatpush1.msra.mxu0 0.0
    %958 = vmatprep.subr.mxu0 0.0
    %959 = vmatpush1.msra.mxu0 0.0
    %960 = vmatprep.subr.mxu0 0.0
    %961 = vmatpush1.msra.mxu0 0.0
    %962 = vmatprep.subr.mxu0 0.0
    %963 = vmatpush1.msra.mxu0 0.0
    %964 = vmatprep.subr.mxu0 0.0
    %965 = vmatpush1.msra.mxu0 0.0
    %966 = vmatprep.subr.mxu0 0.0
    %967 = vmatpush1.msra.mxu0 0.0
    %968 = vmatprep.subr.mxu0 0.0
    %969 = vmatpush1.msra.mxu0 0.0
    %970 = vmatprep.subr.mxu0 0.0
    %971 = vmatpush1.msra.mxu0 0.0
    %972 = vmatprep.subr.mxu0 0.0
    %973 = vmatpush1.msra.mxu0 0.0
    %974 = vmatprep.subr.mxu0 0.0
    %975 = vmatpush1.msra.mxu0 0.0
    %976 = vmatprep.mubr.f32.mxu0 0.0
    %977 = vmatmul.mubr.f32.gmra.mrb[0].mxu0 %v893
    %v978 = vpop.f32.mrb[0].mxu0
    %v979 = vadd.f32 0.0, %v978
    %v980 = vpop.f32.mrb[0].mxu0
    %981 = vmatprep.mubr.f32.mxu0 0.0
    %982 = vmatmul.mubr.f32.gmra.mrb[0].mxu0 %v894
    %v983 = vpop.f32.mrb[0].mxu0
    %v984 = vadd.f32 0.0, %v983
    %v985 = vpop.f32.mrb[0].mxu0
    %986 = vdwg.mxu0
    %987 = vst [vmem:[#allocation2] sm:$0xff] %v979
    %988 = vst [vmem:[#allocation2 + $0x8] sm:$0xff] %v984
    %s989 = scalar_lea.vmem [#allocation6], 128
    %v990 = vld [vmem:[%s989] sm:$0xff]
    %v991 = vld [vmem:[%s989 + $0x8] sm:$0xff]
    %v992 = vld [vmem:[%s989 + $0x10] sm:$0xff]
    %v993 = vld [vmem:[%s989 + $0x18] sm:$0xff]
    %v994 = vld [vmem:[%s989 + $0x20] sm:$0xff]
    %v995 = vld [vmem:[%s989 + $0x28] sm:$0xff]
    %v996 = vld [vmem:[%s989 + $0x30] sm:$0xff]
    %v997 = vld [vmem:[%s989 + $0x38] sm:$0xff]
    %v998 = vld [vmem:[%s989 + $0x40] sm:$0xff]
    %v999 = vld [vmem:[%s989 + $0x48] sm:$0xff]
    %v1000 = vld [vmem:[%s989 + $0x50] sm:$0xff]
    %v1001 = vld [vmem:[%s989 + $0x58] sm:$0xff]
    %v1002 = vld [vmem:[%s989 + $0x60] sm:$0xff]
    %v1003 = vld [vmem:[%s989 + $0x68] sm:$0xff]
    %v1004 = vld [vmem:[%s989 + $0x70] sm:$0xff]
    %v1005 = vld [vmem:[%s989 + $0x78] sm:$0xff]
    %1006 = vmatprep.subr.mxu0 0.0
    %1007 = vmatpush1.msra.mxu0 %v990
    %1008 = vmatprep.subr.mxu0 0.0
    %1009 = vmatpush1.msra.mxu0 %v991
    %1010 = vmatprep.subr.mxu0 0.0
    %1011 = vmatpush1.msra.mxu0 %v992
    %1012 = vmatprep.subr.mxu0 0.0
    %1013 = vmatpush1.msra.mxu0 %v993
    %1014 = vmatprep.subr.mxu0 0.0
    %1015 = vmatpush1.msra.mxu0 %v994
    %1016 = vmatprep.subr.mxu0 0.0
    %1017 = vmatpush1.msra.mxu0 %v995
    %1018 = vmatprep.subr.mxu0 0.0
    %1019 = vmatpush1.msra.mxu0 %v996
    %1020 = vmatprep.subr.mxu0 0.0
    %1021 = vmatpush1.msra.mxu0 %v997
    %1022 = vmatprep.subr.mxu0 0.0
    %1023 = vmatpush1.msra.mxu0 %v998
    %1024 = vmatprep.subr.mxu0 0.0
    %1025 = vmatpush1.msra.mxu0 %v999
    %1026 = vmatprep.subr.mxu0 0.0
    %1027 = vmatpush1.msra.mxu0 %v1000
    %1028 = vmatprep.subr.mxu0 0.0
    %1029 = vmatpush1.msra.mxu0 %v1001
    %1030 = vmatprep.subr.mxu0 0.0
    %1031 = vmatpush1.msra.mxu0 %v1002
    %1032 = vmatprep.subr.mxu0 0.0
    %1033 = vmatpush1.msra.mxu0 %v1003
    %1034 = vmatprep.subr.mxu0 0.0
    %1035 = vmatpush1.msra.mxu0 %v1004
    %1036 = vmatprep.subr.mxu0 0.0
    %1037 = vmatpush1.msra.mxu0 %v1005
    %1038 = vmatprep.subr.mxu0 0.0
    %1039 = vmatpush1.msra.mxu0 0.0
    %1040 = vmatprep.subr.mxu0 0.0
    %1041 = vmatpush1.msra.mxu0 0.0
    %1042 = vmatprep.subr.mxu0 0.0
    %1043 = vmatpush1.msra.mxu0 0.0
    %1044 = vmatprep.subr.mxu0 0.0
    %1045 = vmatpush1.msra.mxu0 0.0
    %1046 = vmatprep.subr.mxu0 0.0
    %1047 = vmatpush1.msra.mxu0 0.0
    %1048 = vmatprep.subr.mxu0 0.0
    %1049 = vmatpush1.msra.mxu0 0.0
    %1050 = vmatprep.subr.mxu0 0.0
    %1051 = vmatpush1.msra.mxu0 0.0
    %1052 = vmatprep.subr.mxu0 0.0
    %1053 = vmatpush1.msra.mxu0 0.0
    %1054 = vmatprep.subr.mxu0 0.0
    %1055 = vmatpush1.msra.mxu0 0.0
    %1056 = vmatprep.subr.mxu0 0.0
    %1057 = vmatpush1.msra.mxu0 0.0
    %1058 = vmatprep.subr.mxu0 0.0
    %1059 = vmatpush1.msra.mxu0 0.0
    %1060 = vmatprep.subr.mxu0 0.0
    %1061 = vmatpush1.msra.mxu0 0.0
    %1062 = vmatprep.subr.mxu0 0.0
    %1063 = vmatpush1.msra.mxu0 0.0
    %1064 = vmatprep.subr.mxu0 0.0
    %1065 = vmatpush1.msra.mxu0 0.0
    %1066 = vmatprep.subr.mxu0 0.0
    %1067 = vmatpush1.msra.mxu0 0.0
    %1068 = vmatprep.subr.mxu0 0.0
    %1069 = vmatpush1.msra.mxu0 0.0
    %1070 = vmatprep.mubr.f32.mxu0 0.0
    %1071 = vmatmul.mubr.f32.gmra.mrb[0].mxu0 %v893
    %v1072 = vpop.f32.mrb[0].mxu0
    %v1073 = vadd.f32 0.0, %v1072
    %v1074 = vpop.f32.mrb[0].mxu0
    %1075 = vmatprep.mubr.f32.mxu0 0.0
    %1076 = vmatmul.mubr.f32.gmra.mrb[0].mxu0 %v894
    %v1077 = vpop.f32.mrb[0].mxu0
    %v1078 = vadd.f32 0.0, %v1077
    %v1079 = vpop.f32.mrb[0].mxu0
    %1080 = vdwg.mxu0
    %1081 = vst [vmem:[#allocation2 + $0x10] sm:$0xff] %v1073
    %1082 = vst [vmem:[#allocation2 + $0x18] sm:$0xff] %v1078
    %s1083 = scalar_lea.vmem [#allocation6], 256
    %v1084 = vld [vmem:[%s1083] sm:$0xff]
    %v1085 = vld [vmem:[%s1083 + $0x8] sm:$0xff]
    %v1086 = vld [vmem:[%s1083 + $0x10] sm:$0xff]
    %v1087 = vld [vmem:[%s1083 + $0x18] sm:$0xff]
    %v1088 = vld [vmem:[%s1083 + $0x20] sm:$0xff]
    %v1089 = vld [vmem:[%s1083 + $0x28] sm:$0xff]
    %v1090 = vld [vmem:[%s1083 + $0x30] sm:$0xff]
    %v1091 = vld [vmem:[%s1083 + $0x38] sm:$0xff]
    %v1092 = vld [vmem:[%s1083 + $0x40] sm:$0xff]
    %v1093 = vld [vmem:[%s1083 + $0x48] sm:$0xff]
    %v1094 = vld [vmem:[%s1083 + $0x50] sm:$0xff]
    %v1095 = vld [vmem:[%s1083 + $0x58] sm:$0xff]
    %v1096 = vld [vmem:[%s1083 + $0x60] sm:$0xff]
    %v1097 = vld [vmem:[%s1083 + $0x68] sm:$0xff]
    %v1098 = vld [vmem:[%s1083 + $0x70] sm:$0xff]
    %v1099 = vld [vmem:[%s1083 + $0x78] sm:$0xff]
    %1100 = vmatprep.subr.mxu0 0.0
    %1101 = vmatpush1.msra.mxu0 %v1084
    %1102 = vmatprep.subr.mxu0 0.0
    %1103 = vmatpush1.msra.mxu0 %v1085
    %1104 = vmatprep.subr.mxu0 0.0
    %1105 = vmatpush1.msra.mxu0 %v1086
    %1106 = vmatprep.subr.mxu0 0.0
    %1107 = vmatpush1.msra.mxu0 %v1087
    %1108 = vmatprep.subr.mxu0 0.0
    %1109 = vmatpush1.msra.mxu0 %v1088
    %1110 = vmatprep.subr.mxu0 0.0
    %1111 = vmatpush1.msra.mxu0 %v1089
    %1112 = vmatprep.subr.mxu0 0.0
    %1113 = vmatpush1.msra.mxu0 %v1090
    %1114 = vmatprep.subr.mxu0 0.0
    %1115 = vmatpush1.msra.mxu0 %v1091
    %1116 = vmatprep.subr.mxu0 0.0
    %1117 = vmatpush1.msra.mxu0 %v1092
    %1118 = vmatprep.subr.mxu0 0.0
    %1119 = vmatpush1.msra.mxu0 %v1093
    %1120 = vmatprep.subr.mxu0 0.0
    %1121 = vmatpush1.msra.mxu0 %v1094
    %1122 = vmatprep.subr.mxu0 0.0
    %1123 = vmatpush1.msra.mxu0 %v1095
    %1124 = vmatprep.subr.mxu0 0.0
    %1125 = vmatpush1.msra.mxu0 %v1096
    %1126 = vmatprep.subr.mxu0 0.0
    %1127 = vmatpush1.msra.mxu0 %v1097
    %1128 = vmatprep.subr.mxu0 0.0
    %1129 = vmatpush1.msra.mxu0 %v1098
    %1130 = vmatprep.subr.mxu0 0.0
    %1131 = vmatpush1.msra.mxu0 %v1099
    %1132 = vmatprep.subr.mxu0 0.0
    %1133 = vmatpush1.msra.mxu0 0.0
    %1134 = vmatprep.subr.mxu0 0.0
    %1135 = vmatpush1.msra.mxu0 0.0
    %1136 = vmatprep.subr.mxu0 0.0
    %1137 = vmatpush1.msra.mxu0 0.0
    %1138 = vmatprep.subr.mxu0 0.0
    %1139 = vmatpush1.msra.mxu0 0.0
    %1140 = vmatprep.subr.mxu0 0.0
    %1141 = vmatpush1.msra.mxu0 0.0
    %1142 = vmatprep.subr.mxu0 0.0
    %1143 = vmatpush1.msra.mxu0 0.0
    %1144 = vmatprep.subr.mxu0 0.0
    %1145 = vmatpush1.msra.mxu0 0.0
    %1146 = vmatprep.subr.mxu0 0.0
    %1147 = vmatpush1.msra.mxu0 0.0
    %1148 = vmatprep.subr.mxu0 0.0
    %1149 = vmatpush1.msra.mxu0 0.0
    %1150 = vmatprep.subr.mxu0 0.0
    %1151 = vmatpush1.msra.mxu0 0.0
    %1152 = vmatprep.subr.mxu0 0.0
    %1153 = vmatpush1.msra.mxu0 0.0
    %1154 = vmatprep.subr.mxu0 0.0
    %1155 = vmatpush1.msra.mxu0 0.0
    %1156 = vmatprep.subr.mxu0 0.0
    %1157 = vmatpush1.msra.mxu0 0.0
    %1158 = vmatprep.subr.mxu0 0.0
    %1159 = vmatpush1.msra.mxu0 0.0
    %1160 = vmatprep.subr.mxu0 0.0
    %1161 = vmatpush1.msra.mxu0 0.0
    %1162 = vmatprep.subr.mxu0 0.0
    %1163 = vmatpush1.msra.mxu0 0.0
    %1164 = vmatprep.mubr.f32.mxu0 0.0
    %1165 = vmatmul.mubr.f32.gmra.mrb[0].mxu0 %v893
    %v1166 = vpop.f32.mrb[0].mxu0
    %v1167 = vadd.f32 0.0, %v1166
    %v1168 = vpop.f32.mrb[0].mxu0
    %1169 = vmatprep.mubr.f32.mxu0 0.0
    %1170 = vmatmul.mubr.f32.gmra.mrb[0].mxu0 %v894
    %v1171 = vpop.f32.mrb[0].mxu0
    %v1172 = vadd.f32 0.0, %v1171
    %v1173 = vpop.f32.mrb[0].mxu0
    %1174 = vdwg.mxu0
    %1175 = vst [vmem:[#allocation2 + $0x20] sm:$0xff] %v1167
    %1176 = vst [vmem:[#allocation2 + $0x28] sm:$0xff] %v1172
    %s1177 = scalar_lea.vmem [#allocation6], 384
    %v1178 = vld [vmem:[%s1177] sm:$0xff]
    %v1179 = vld [vmem:[%s1177 + $0x8] sm:$0xff]
    %v1180 = vld [vmem:[%s1177 + $0x10] sm:$0xff]
    %v1181 = vld [vmem:[%s1177 + $0x18] sm:$0xff]
    %v1182 = vld [vmem:[%s1177 + $0x20] sm:$0xff]
    %v1183 = vld [vmem:[%s1177 + $0x28] sm:$0xff]
    %v1184 = vld [vmem:[%s1177 + $0x30] sm:$0xff]
    %v1185 = vld [vmem:[%s1177 + $0x38] sm:$0xff]
    %v1186 = vld [vmem:[%s1177 + $0x40] sm:$0xff]
    %v1187 = vld [vmem:[%s1177 + $0x48] sm:$0xff]
    %v1188 = vld [vmem:[%s1177 + $0x50] sm:$0xff]
    %v1189 = vld [vmem:[%s1177 + $0x58] sm:$0xff]
    %v1190 = vld [vmem:[%s1177 + $0x60] sm:$0xff]
    %v1191 = vld [vmem:[%s1177 + $0x68] sm:$0xff]
    %v1192 = vld [vmem:[%s1177 + $0x70] sm:$0xff]
    %v1193 = vld [vmem:[%s1177 + $0x78] sm:$0xff]
    %1194 = vmatprep.subr.mxu0 0.0
    %1195 = vmatpush1.msra.mxu0 %v1178
    %1196 = vmatprep.subr.mxu0 0.0
    %1197 = vmatpush1.msra.mxu0 %v1179
    %1198 = vmatprep.subr.mxu0 0.0
    %1199 = vmatpush1.msra.mxu0 %v1180
    %1200 = vmatprep.subr.mxu0 0.0
    %1201 = vmatpush1.msra.mxu0 %v1181
    %1202 = vmatprep.subr.mxu0 0.0
    %1203 = vmatpush1.msra.mxu0 %v1182
    %1204 = vmatprep.subr.mxu0 0.0
    %1205 = vmatpush1.msra.mxu0 %v1183
    %1206 = vmatprep.subr.mxu0 0.0
    %1207 = vmatpush1.msra.mxu0 %v1184
    %1208 = vmatprep.subr.mxu0 0.0
    %1209 = vmatpush1.msra.mxu0 %v1185
    %1210 = vmatprep.subr.mxu0 0.0
    %1211 = vmatpush1.msra.mxu0 %v1186
    %1212 = vmatprep.subr.mxu0 0.0
    %1213 = vmatpush1.msra.mxu0 %v1187
    %1214 = vmatprep.subr.mxu0 0.0
    %1215 = vmatpush1.msra.mxu0 %v1188
    %1216 = vmatprep.subr.mxu0 0.0
    %1217 = vmatpush1.msra.mxu0 %v1189
    %1218 = vmatprep.subr.mxu0 0.0
    %1219 = vmatpush1.msra.mxu0 %v1190
    %1220 = vmatprep.subr.mxu0 0.0
    %1221 = vmatpush1.msra.mxu0 %v1191
    %1222 = vmatprep.subr.mxu0 0.0
    %1223 = vmatpush1.msra.mxu0 %v1192
    %1224 = vmatprep.subr.mxu0 0.0
    %1225 = vmatpush1.msra.mxu0 %v1193
    %1226 = vmatprep.subr.mxu0 0.0
    %1227 = vmatpush1.msra.mxu0 0.0
    %1228 = vmatprep.subr.mxu0 0.0
    %1229 = vmatpush1.msra.mxu0 0.0
    %1230 = vmatprep.subr.mxu0 0.0
    %1231 = vmatpush1.msra.mxu0 0.0
    %1232 = vmatprep.subr.mxu0 0.0
    %1233 = vmatpush1.msra.mxu0 0.0
    %1234 = vmatprep.subr.mxu0 0.0
    %1235 = vmatpush1.msra.mxu0 0.0
    %1236 = vmatprep.subr.mxu0 0.0
    %1237 = vmatpush1.msra.mxu0 0.0
    %1238 = vmatprep.subr.mxu0 0.0
    %1239 = vmatpush1.msra.mxu0 0.0
    %1240 = vmatprep.subr.mxu0 0.0
    %1241 = vmatpush1.msra.mxu0 0.0
    %1242 = vmatprep.subr.mxu0 0.0
    %1243 = vmatpush1.msra.mxu0 0.0
    %1244 = vmatprep.subr.mxu0 0.0
    %1245 = vmatpush1.msra.mxu0 0.0
    %1246 = vmatprep.subr.mxu0 0.0
    %1247 = vmatpush1.msra.mxu0 0.0
    %1248 = vmatprep.subr.mxu0 0.0
    %1249 = vmatpush1.msra.mxu0 0.0
    %1250 = vmatprep.subr.mxu0 0.0
    %1251 = vmatpush1.msra.mxu0 0.0
    %1252 = vmatprep.subr.mxu0 0.0
    %1253 = vmatpush1.msra.mxu0 0.0
    %1254 = vmatprep.subr.mxu0 0.0
    %1255 = vmatpush1.msra.mxu0 0.0
    %1256 = vmatprep.subr.mxu0 0.0
    %1257 = vmatpush1.msra.mxu0 0.0
    %1258 = vmatprep.mubr.f32.mxu0 0.0
    %1259 = vmatmul.mubr.f32.gmra.mrb[0].mxu0 %v893
    %v1260 = vpop.f32.mrb[0].mxu0
    %v1261 = vadd.f32 0.0, %v1260
    %v1262 = vpop.f32.mrb[0].mxu0
    %1263 = vmatprep.mubr.f32.mxu0 0.0
    %1264 = vmatmul.mubr.f32.gmra.mrb[0].mxu0 %v894
    %v1265 = vpop.f32.mrb[0].mxu0
    %v1266 = vadd.f32 0.0, %v1265
    %v1267 = vpop.f32.mrb[0].mxu0
    %1268 = vdwg.mxu0
    %1269 = vst [vmem:[#allocation2 + $0x30] sm:$0xff] %v1261
    %1270 = vst [vmem:[#allocation2 + $0x38] sm:$0xff] %v1266
    %s1271 = scalar_lea.vmem [#allocation6], 512
    %v1272 = vld [vmem:[%s1271] sm:$0xff]
    %v1273 = vld [vmem:[%s1271 + $0x8] sm:$0xff]
    %v1274 = vld [vmem:[%s1271 + $0x10] sm:$0xff]
    %v1275 = vld [vmem:[%s1271 + $0x18] sm:$0xff]
    %v1276 = vld [vmem:[%s1271 + $0x20] sm:$0xff]
    %v1277 = vld [vmem:[%s1271 + $0x28] sm:$0xff]
    %v1278 = vld [vmem:[%s1271 + $0x30] sm:$0xff]
    %v1279 = vld [vmem:[%s1271 + $0x38] sm:$0xff]
    %v1280 = vld [vmem:[%s1271 + $0x40] sm:$0xff]
    %v1281 = vld [vmem:[%s1271 + $0x48] sm:$0xff]
    %v1282 = vld [vmem:[%s1271 + $0x50] sm:$0xff]
    %v1283 = vld [vmem:[%s1271 + $0x58] sm:$0xff]
    %v1284 = vld [vmem:[%s1271 + $0x60] sm:$0xff]
    %v1285 = vld [vmem:[%s1271 + $0x68] sm:$0xff]
    %v1286 = vld [vmem:[%s1271 + $0x70] sm:$0xff]
    %v1287 = vld [vmem:[%s1271 + $0x78] sm:$0xff]
    %1288 = vmatprep.subr.mxu0 0.0
    %1289 = vmatpush1.msra.mxu0 %v1272
    %1290 = vmatprep.subr.mxu0 0.0
    %1291 = vmatpush1.msra.mxu0 %v1273
    %1292 = vmatprep.subr.mxu0 0.0
    %1293 = vmatpush1.msra.mxu0 %v1274
    %1294 = vmatprep.subr.mxu0 0.0
    %1295 = vmatpush1.msra.mxu0 %v1275
    %1296 = vmatprep.subr.mxu0 0.0
    %1297 = vmatpush1.msra.mxu0 %v1276
    %1298 = vmatprep.subr.mxu0 0.0
    %1299 = vmatpush1.msra.mxu0 %v1277
    %1300 = vmatprep.subr.mxu0 0.0
    %1301 = vmatpush1.msra.mxu0 %v1278
    %1302 = vmatprep.subr.mxu0 0.0
    %1303 = vmatpush1.msra.mxu0 %v1279
    %1304 = vmatprep.subr.mxu0 0.0
    %1305 = vmatpush1.msra.mxu0 %v1280
    %1306 = vmatprep.subr.mxu0 0.0
    %1307 = vmatpush1.msra.mxu0 %v1281
    %1308 = vmatprep.subr.mxu0 0.0
    %1309 = vmatpush1.msra.mxu0 %v1282
    %1310 = vmatprep.subr.mxu0 0.0
    %1311 = vmatpush1.msra.mxu0 %v1283
    %1312 = vmatprep.subr.mxu0 0.0
    %1313 = vmatpush1.msra.mxu0 %v1284
    %1314 = vmatprep.subr.mxu0 0.0
    %1315 = vmatpush1.msra.mxu0 %v1285
    %1316 = vmatprep.subr.mxu0 0.0
    %1317 = vmatpush1.msra.mxu0 %v1286
    %1318 = vmatprep.subr.mxu0 0.0
    %1319 = vmatpush1.msra.mxu0 %v1287
    %1320 = vmatprep.subr.mxu0 0.0
    %1321 = vmatpush1.msra.mxu0 0.0
    %1322 = vmatprep.subr.mxu0 0.0
    %1323 = vmatpush1.msra.mxu0 0.0
    %1324 = vmatprep.subr.mxu0 0.0
    %1325 = vmatpush1.msra.mxu0 0.0
    %1326 = vmatprep.subr.mxu0 0.0
    %1327 = vmatpush1.msra.mxu0 0.0
    %1328 = vmatprep.subr.mxu0 0.0
    %1329 = vmatpush1.msra.mxu0 0.0
    %1330 = vmatprep.subr.mxu0 0.0
    %1331 = vmatpush1.msra.mxu0 0.0
    %1332 = vmatprep.subr.mxu0 0.0
    %1333 = vmatpush1.msra.mxu0 0.0
    %1334 = vmatprep.subr.mxu0 0.0
    %1335 = vmatpush1.msra.mxu0 0.0
    %1336 = vmatprep.subr.mxu0 0.0
    %1337 = vmatpush1.msra.mxu0 0.0
    %1338 = vmatprep.subr.mxu0 0.0
    %1339 = vmatpush1.msra.mxu0 0.0
    %1340 = vmatprep.subr.mxu0 0.0
    %1341 = vmatpush1.msra.mxu0 0.0
    %1342 = vmatprep.subr.mxu0 0.0
    %1343 = vmatpush1.msra.mxu0 0.0
    %1344 = vmatprep.subr.mxu0 0.0
    %1345 = vmatpush1.msra.mxu0 0.0
    %1346 = vmatprep.subr.mxu0 0.0
    %1347 = vmatpush1.msra.mxu0 0.0
    %1348 = vmatprep.subr.mxu0 0.0
    %1349 = vmatpush1.msra.mxu0 0.0
    %1350 = vmatprep.subr.mxu0 0.0
    %1351 = vmatpush1.msra.mxu0 0.0
    %1352 = vmatprep.mubr.f32.mxu0 0.0
    %1353 = vmatmul.mubr.f32.gmra.mrb[0].mxu0 %v893
    %v1354 = vpop.f32.mrb[0].mxu0
    %v1355 = vadd.f32 0.0, %v1354
    %v1356 = vpop.f32.mrb[0].mxu0
    %1357 = vmatprep.mubr.f32.mxu0 0.0
    %1358 = vmatmul.mubr.f32.gmra.mrb[0].mxu0 %v894
    %v1359 = vpop.f32.mrb[0].mxu0
    %v1360 = vadd.f32 0.0, %v1359
    %v1361 = vpop.f32.mrb[0].mxu0
    %1362 = vdwg.mxu0
    %1363 = vst [vmem:[#allocation2 + $0x40] sm:$0xff] %v1355
    %1364 = vst [vmem:[#allocation2 + $0x48] sm:$0xff] %v1360
    %s1365 = scalar_lea.vmem [#allocation6], 640
    %v1366 = vld [vmem:[%s1365] sm:$0xff]
    %v1367 = vld [vmem:[%s1365 + $0x8] sm:$0xff]
    %v1368 = vld [vmem:[%s1365 + $0x10] sm:$0xff]
    %v1369 = vld [vmem:[%s1365 + $0x18] sm:$0xff]
    %v1370 = vld [vmem:[%s1365 + $0x20] sm:$0xff]
    %v1371 = vld [vmem:[%s1365 + $0x28] sm:$0xff]
    %v1372 = vld [vmem:[%s1365 + $0x30] sm:$0xff]
    %v1373 = vld [vmem:[%s1365 + $0x38] sm:$0xff]
    %v1374 = vld [vmem:[%s1365 + $0x40] sm:$0xff]
    %v1375 = vld [vmem:[%s1365 + $0x48] sm:$0xff]
    %v1376 = vld [vmem:[%s1365 + $0x50] sm:$0xff]
    %v1377 = vld [vmem:[%s1365 + $0x58] sm:$0xff]
    %v1378 = vld [vmem:[%s1365 + $0x60] sm:$0xff]
    %v1379 = vld [vmem:[%s1365 + $0x68] sm:$0xff]
    %v1380 = vld [vmem:[%s1365 + $0x70] sm:$0xff]
    %v1381 = vld [vmem:[%s1365 + $0x78] sm:$0xff]
    %1382 = vmatprep.subr.mxu0 0.0
    %1383 = vmatpush1.msra.mxu0 %v1366
    %1384 = vmatprep.subr.mxu0 0.0
    %1385 = vmatpush1.msra.mxu0 %v1367
    %1386 = vmatprep.subr.mxu0 0.0
    %1387 = vmatpush1.msra.mxu0 %v1368
    %1388 = vmatprep.subr.mxu0 0.0
    %1389 = vmatpush1.msra.mxu0 %v1369
    %1390 = vmatprep.subr.mxu0 0.0
    %1391 = vmatpush1.msra.mxu0 %v1370
    %1392 = vmatprep.subr.mxu0 0.0
    %1393 = vmatpush1.msra.mxu0 %v1371
    %1394 = vmatprep.subr.mxu0 0.0
    %1395 = vmatpush1.msra.mxu0 %v1372
    %1396 = vmatprep.subr.mxu0 0.0
    %1397 = vmatpush1.msra.mxu0 %v1373
    %1398 = vmatprep.subr.mxu0 0.0
    %1399 = vmatpush1.msra.mxu0 %v1374
    %1400 = vmatprep.subr.mxu0 0.0
    %1401 = vmatpush1.msra.mxu0 %v1375
    %1402 = vmatprep.subr.mxu0 0.0
    %1403 = vmatpush1.msra.mxu0 %v1376
    %1404 = vmatprep.subr.mxu0 0.0
    %1405 = vmatpush1.msra.mxu0 %v1377
    %1406 = vmatprep.subr.mxu0 0.0
    %1407 = vmatpush1.msra.mxu0 %v1378
    %1408 = vmatprep.subr.mxu0 0.0
    %1409 = vmatpush1.msra.mxu0 %v1379
    %1410 = vmatprep.subr.mxu0 0.0
    %1411 = vmatpush1.msra.mxu0 %v1380
    %1412 = vmatprep.subr.mxu0 0.0
    %1413 = vmatpush1.msra.mxu0 %v1381
    %1414 = vmatprep.subr.mxu0 0.0
    %1415 = vmatpush1.msra.mxu0 0.0
    %1416 = vmatprep.subr.mxu0 0.0
    %1417 = vmatpush1.msra.mxu0 0.0
    %1418 = vmatprep.subr.mxu0 0.0
    %1419 = vmatpush1.msra.mxu0 0.0
    %1420 = vmatprep.subr.mxu0 0.0
    %1421 = vmatpush1.msra.mxu0 0.0
    %1422 = vmatprep.subr.mxu0 0.0
    %1423 = vmatpush1.msra.mxu0 0.0
    %1424 = vmatprep.subr.mxu0 0.0
    %1425 = vmatpush1.msra.mxu0 0.0
    %1426 = vmatprep.subr.mxu0 0.0
    %1427 = vmatpush1.msra.mxu0 0.0
    %1428 = vmatprep.subr.mxu0 0.0
    %1429 = vmatpush1.msra.mxu0 0.0
    %1430 = vmatprep.subr.mxu0 0.0
    %1431 = vmatpush1.msra.mxu0 0.0
    %1432 = vmatprep.subr.mxu0 0.0
    %1433 = vmatpush1.msra.mxu0 0.0
    %1434 = vmatprep.subr.mxu0 0.0
    %1435 = vmatpush1.msra.mxu0 0.0
    %1436 = vmatprep.subr.mxu0 0.0
    %1437 = vmatpush1.msra.mxu0 0.0
    %1438 = vmatprep.subr.mxu0 0.0
    %1439 = vmatpush1.msra.mxu0 0.0
    %1440 = vmatprep.subr.mxu0 0.0
    %1441 = vmatpush1.msra.mxu0 0.0
    %1442 = vmatprep.subr.mxu0 0.0
    %1443 = vmatpush1.msra.mxu0 0.0
    %1444 = vmatprep.subr.mxu0 0.0
    %1445 = vmatpush1.msra.mxu0 0.0
    %1446 = vmatprep.mubr.f32.mxu0 0.0
    %1447 = vmatmul.mubr.f32.gmra.mrb[0].mxu0 %v893
    %v1448 = vpop.f32.mrb[0].mxu0
    %v1449 = vadd.f32 0.0, %v1448
    %v1450 = vpop.f32.mrb[0].mxu0
    %1451 = vmatprep.mubr.f32.mxu0 0.0
    %1452 = vmatmul.mubr.f32.gmra.mrb[0].mxu0 %v894
    %v1453 = vpop.f32.mrb[0].mxu0
    %v1454 = vadd.f32 0.0, %v1453
    %v1455 = vpop.f32.mrb[0].mxu0
    %1456 = vdwg.mxu0
    %1457 = vst [vmem:[#allocation2 + $0x50] sm:$0xff] %v1449
    %1458 = vst [vmem:[#allocation2 + $0x58] sm:$0xff] %v1454
    %v1459 = vld [vmem:[%s5] sm:$0xff]
    %v1460 = vld [vmem:[#allocation2] sm:$0xff]
    %v1461 = vld [vmem:[#allocation2 + $0x8] sm:$0xff]
    %v1462 = vld [vmem:[#allocation2 + $0x10] sm:$0xff]
    %v1463 = vld [vmem:[#allocation2 + $0x18] sm:$0xff]
    %v1464 = vld [vmem:[#allocation2 + $0x20] sm:$0xff]
    %v1465 = vld [vmem:[#allocation2 + $0x28] sm:$0xff]
    %v1466 = vld [vmem:[#allocation2 + $0x30] sm:$0xff]
    %v1467 = vld [vmem:[#allocation2 + $0x38] sm:$0xff]
    %v1468 = vld [vmem:[#allocation2 + $0x40] sm:$0xff]
    %v1469 = vld [vmem:[#allocation2 + $0x48] sm:$0xff]
    %v1470 = vld [vmem:[#allocation2 + $0x50] sm:$0xff]
    %v1471 = vld [vmem:[#allocation2 + $0x58] sm:$0xff]
    %v1473 = vsel %vm735, %v1459, 0
    %1475 = vmatprep.subr.mxu0 0.0
    %1476 = vmatpush1.msra.mxu0 %v1460
    %1477 = vmatprep.subr.mxu0 0.0
    %1478 = vmatpush1.msra.mxu0 %v1461
    %1479 = vmatprep.subr.mxu0 0.0
    %1480 = vmatpush1.msra.mxu0 %v1462
    %1481 = vmatprep.subr.mxu0 0.0
    %1482 = vmatpush1.msra.mxu0 %v1463
    %1483 = vmatprep.subr.mxu0 0.0
    %1484 = vmatpush1.msra.mxu0 %v1464
    %1485 = vmatprep.subr.mxu0 0.0
    %1486 = vmatpush1.msra.mxu0 %v1465
    %1487 = vmatprep.subr.mxu0 0.0
    %1488 = vmatpush1.msra.mxu0 %v1466
    %1489 = vmatprep.subr.mxu0 0.0
    %1490 = vmatpush1.msra.mxu0 %v1467
    %1491 = vmatprep.subr.mxu0 0.0
    %1492 = vmatpush1.msra.mxu0 %v1468
    %1493 = vmatprep.subr.mxu0 0.0
    %1494 = vmatpush1.msra.mxu0 %v1469
    %1495 = vmatprep.subr.mxu0 0.0
    %1496 = vmatpush1.msra.mxu0 %v1470
    %1497 = vmatprep.subr.mxu0 0.0
    %1498 = vmatpush1.msra.mxu0 %v1471
    %1499 = vmatprep.subr.mxu0 0.0
    %1500 = vmatpush1.msra.mxu0 0.0
    %1501 = vmatprep.subr.mxu0 0.0
    %1502 = vmatpush1.msra.mxu0 0.0
    %1503 = vmatprep.subr.mxu0 0.0
    %1504 = vmatpush1.msra.mxu0 0.0
    %1505 = vmatprep.subr.mxu0 0.0
    %1506 = vmatpush1.msra.mxu0 0.0
    %1507 = vmatprep.subr.mxu0 0.0
    %1508 = vmatpush1.msra.mxu0 0.0
    %1509 = vmatprep.subr.mxu0 0.0
    %1510 = vmatpush1.msra.mxu0 0.0
    %1511 = vmatprep.subr.mxu0 0.0
    %1512 = vmatpush1.msra.mxu0 0.0
    %1513 = vmatprep.subr.mxu0 0.0
    %1514 = vmatpush1.msra.mxu0 0.0
    %1515 = vmatprep.subr.mxu0 0.0
    %1516 = vmatpush1.msra.mxu0 0.0
    %1517 = vmatprep.subr.mxu0 0.0
    %1518 = vmatpush1.msra.mxu0 0.0
    %1519 = vmatprep.subr.mxu0 0.0
    %1520 = vmatpush1.msra.mxu0 0.0
    %1521 = vmatprep.subr.mxu0 0.0
    %1522 = vmatpush1.msra.mxu0 0.0
    %1523 = vmatprep.subr.mxu0 0.0
    %1524 = vmatpush1.msra.mxu0 0.0
    %1525 = vmatprep.subr.mxu0 0.0
    %1526 = vmatpush1.msra.mxu0 0.0
    %1527 = vmatprep.subr.mxu0 0.0
    %1528 = vmatpush1.msra.mxu0 0.0
    %1529 = vmatprep.subr.mxu0 0.0
    %1530 = vmatpush1.msra.mxu0 0.0
    %1531 = vmatprep.subr.mxu0 0.0
    %1532 = vmatpush1.msra.mxu0 0.0
    %1533 = vmatprep.subr.mxu0 0.0
    %1534 = vmatpush1.msra.mxu0 0.0
    %1535 = vmatprep.subr.mxu0 0.0
    %1536 = vmatpush1.msra.mxu0 0.0
    %1537 = vmatprep.subr.mxu0 0.0
    %1538 = vmatpush1.msra.mxu0 0.0
    %1539 = vmatprep.mubr.f32.mxu0 0.0
    %1540 = vmatmul.mubr.f32.gmra.mrb[0].mxu0 %v1473
    %v1541 = vpop.f32.mrb[0].mxu0
    %v1542 = vadd.f32 0.0, %v1541
    %v1543 = vpop.f32.mrb[0].mxu0
    %1544 = vdwg.mxu0
    %v1545 = vmax.f32 %v1542, 0.0
    %vm1546 = vcmask 130048
    %v1548 = vsel %vm1546, %v895, 0
    %1550 = vmatprep.subr.mxu0 0.0
    %1551 = vmatpush1.msra.mxu0 %v893
    %1552 = vmatprep.subr.mxu0 0.0
    %1553 = vmatpush1.msra.mxu0 %v894
    %1554 = vmatprep.subr.mxu0 0.0
    %1555 = vmatpush1.msra.mxu0 0.0
    %1556 = vmatprep.subr.mxu0 0.0
    %1557 = vmatpush1.msra.mxu0 0.0
    %1558 = vmatprep.subr.mxu0 0.0
    %1559 = vmatpush1.msra.mxu0 0.0
    %1560 = vmatprep.subr.mxu0 0.0
    %1561 = vmatpush1.msra.mxu0 0.0
    %1562 = vmatprep.subr.mxu0 0.0
    %1563 = vmatpush1.msra.mxu0 0.0
    %1564 = vmatprep.subr.mxu0 0.0
    %1565 = vmatpush1.msra.mxu0 0.0
    %1566 = vmatprep.subr.mxu0 0.0
    %1567 = vmatpush1.msra.mxu0 0.0
    %1568 = vmatprep.subr.mxu0 0.0
    %1569 = vmatpush1.msra.mxu0 0.0
    %1570 = vmatprep.subr.mxu0 0.0
    %1571 = vmatpush1.msra.mxu0 0.0
    %1572 = vmatprep.subr.mxu0 0.0
    %1573 = vmatpush1.msra.mxu0 0.0
    %1574 = vmatprep.subr.mxu0 0.0
    %1575 = vmatpush1.msra.mxu0 0.0
    %1576 = vmatprep.subr.mxu0 0.0
    %1577 = vmatpush1.msra.mxu0 0.0
    %1578 = vmatprep.subr.mxu0 0.0
    %1579 = vmatpush1.msra.mxu0 0.0
    %1580 = vmatprep.subr.mxu0 0.0
    %1581 = vmatpush1.msra.mxu0 0.0
    %1582 = vmatprep.subr.mxu0 0.0
    %1583 = vmatpush1.msra.mxu0 0.0
    %1584 = vmatprep.subr.mxu0 0.0
    %1585 = vmatpush1.msra.mxu0 0.0
    %1586 = vmatprep.subr.mxu0 0.0
    %1587 = vmatpush1.msra.mxu0 0.0
    %1588 = vmatprep.subr.mxu0 0.0
    %1589 = vmatpush1.msra.mxu0 0.0
    %1590 = vmatprep.subr.mxu0 0.0
    %1591 = vmatpush1.msra.mxu0 0.0
    %1592 = vmatprep.subr.mxu0 0.0
    %1593 = vmatpush1.msra.mxu0 0.0
    %1594 = vmatprep.subr.mxu0 0.0
    %1595 = vmatpush1.msra.mxu0 0.0
    %1596 = vmatprep.subr.mxu0 0.0
    %1597 = vmatpush1.msra.mxu0 0.0
    %1598 = vmatprep.subr.mxu0 0.0
    %1599 = vmatpush1.msra.mxu0 0.0
    %1600 = vmatprep.subr.mxu0 0.0
    %1601 = vmatpush1.msra.mxu0 0.0
    %1602 = vmatprep.subr.mxu0 0.0
    %1603 = vmatpush1.msra.mxu0 0.0
    %1604 = vmatprep.subr.mxu0 0.0
    %1605 = vmatpush1.msra.mxu0 0.0
    %1606 = vmatprep.subr.mxu0 0.0
    %1607 = vmatpush1.msra.mxu0 0.0
    %1608 = vmatprep.subr.mxu0 0.0
    %1609 = vmatpush1.msra.mxu0 0.0
    %1610 = vmatprep.subr.mxu0 0.0
    %1611 = vmatpush1.msra.mxu0 0.0
    %1612 = vmatprep.subr.mxu0 0.0
    %1613 = vmatpush1.msra.mxu0 0.0
    %1614 = vmatprep.mubr.f32.mxu0 0.0
    %1615 = vmatmul.mubr.f32.gmra.mrb[0].mxu0 %v1548
    %v1616 = vpop.f32.mrb[0].mxu0
    %v1617 = vadd.f32 %v1545, %v1616
    %v1618 = vpop.f32.mrb[0].mxu0
    %1619 = vdwg.mxu0
    %v1620 = vlaneseq
    %v1621 = vand.u32 %v1620, 127
    %vm1622 = vcmp.lt.s32.totalorder %v1621, 32
    %v1623 = vsel %vm1622, %v1617, 0.0
    %v1624 = vmul.f32 %v1623, %v1623
    %1625 = vadd.xlane.f32.xlu0 %v1624
    %v1626 = vpop.xlane.xlu0 %1625
    %v1627 = vmax.f32 %v1626, 1e-24
    %v1628 = vrsqrt.pop %v1627
    %v1629 = vmul.f32 %v1623, %v1628
    %vm1630 = vcmp.eq.s32.totalorder %v1621, 32
    %v1631 = vsel %vm1630, 1.0, %v1629
    %v1632 = vld [vmem:[#allocation8] sm:$0xff]
    %v1633 = vld [vmem:[#allocation8 + $0x8] sm:$0xff]
    %v1634 = vld [vmem:[#allocation8 + $0x10] sm:$0xff]
    %v1635 = vld [vmem:[#allocation8 + $0x18] sm:$0xff]
    %v1636 = vld [vmem:[#allocation8 + $0x20] sm:$0xff]
    %v1637 = vld [vmem:[#allocation8 + $0x28] sm:$0xff]
    %v1638 = vld [vmem:[#allocation8 + $0x30] sm:$0xff]
    %v1639 = vld [vmem:[#allocation8 + $0x38] sm:$0xff]
    %v1640 = vld [vmem:[#allocation8 + $0x40] sm:$0xff]
    %v1641 = vld [vmem:[#allocation8 + $0x48] sm:$0xff]
    %v1642 = vld [vmem:[#allocation8 + $0x50] sm:$0xff]
    %v1643 = vld [vmem:[#allocation8 + $0x58] sm:$0xff]
    %v1644 = vld [vmem:[#allocation8 + $0x60] sm:$0xff]
    %v1645 = vld [vmem:[#allocation8 + $0x68] sm:$0xff]
    %v1646 = vld [vmem:[#allocation8 + $0x70] sm:$0xff]
    %v1647 = vld [vmem:[#allocation8 + $0x78] sm:$0xff]
    %1648 = vmatprep.subr.mxu0 0.0
    %1649 = vmatpush1.msra.mxu0 %v1632
    %1650 = vmatprep.subr.mxu0 0.0
    %1651 = vmatpush1.msra.mxu0 %v1633
    %1652 = vmatprep.subr.mxu0 0.0
    %1653 = vmatpush1.msra.mxu0 %v1634
    %1654 = vmatprep.subr.mxu0 0.0
    %1655 = vmatpush1.msra.mxu0 %v1635
    %1656 = vmatprep.subr.mxu0 0.0
    %1657 = vmatpush1.msra.mxu0 %v1636
    %1658 = vmatprep.subr.mxu0 0.0
    %1659 = vmatpush1.msra.mxu0 %v1637
    %1660 = vmatprep.subr.mxu0 0.0
    %1661 = vmatpush1.msra.mxu0 %v1638
    %1662 = vmatprep.subr.mxu0 0.0
    %1663 = vmatpush1.msra.mxu0 %v1639
    %1664 = vmatprep.subr.mxu0 0.0
    %1665 = vmatpush1.msra.mxu0 %v1640
    %1666 = vmatprep.subr.mxu0 0.0
    %1667 = vmatpush1.msra.mxu0 %v1641
    %1668 = vmatprep.subr.mxu0 0.0
    %1669 = vmatpush1.msra.mxu0 %v1642
    %1670 = vmatprep.subr.mxu0 0.0
    %1671 = vmatpush1.msra.mxu0 %v1643
    %1672 = vmatprep.subr.mxu0 0.0
    %1673 = vmatpush1.msra.mxu0 %v1644
    %1674 = vmatprep.subr.mxu0 0.0
    %1675 = vmatpush1.msra.mxu0 %v1645
    %1676 = vmatprep.subr.mxu0 0.0
    %1677 = vmatpush1.msra.mxu0 %v1646
    %1678 = vmatprep.subr.mxu0 0.0
    %1679 = vmatpush1.msra.mxu0 %v1647
    %1680 = vmatprep.subr.mxu0 0.0
    %1681 = vmatpush1.msra.mxu0 0.0
    %1682 = vmatprep.subr.mxu0 0.0
    %1683 = vmatpush1.msra.mxu0 0.0
    %1684 = vmatprep.subr.mxu0 0.0
    %1685 = vmatpush1.msra.mxu0 0.0
    %1686 = vmatprep.subr.mxu0 0.0
    %1687 = vmatpush1.msra.mxu0 0.0
    %1688 = vmatprep.subr.mxu0 0.0
    %1689 = vmatpush1.msra.mxu0 0.0
    %1690 = vmatprep.subr.mxu0 0.0
    %1691 = vmatpush1.msra.mxu0 0.0
    %1692 = vmatprep.subr.mxu0 0.0
    %1693 = vmatpush1.msra.mxu0 0.0
    %1694 = vmatprep.subr.mxu0 0.0
    %1695 = vmatpush1.msra.mxu0 0.0
    %1696 = vmatprep.subr.mxu0 0.0
    %1697 = vmatpush1.msra.mxu0 0.0
    %1698 = vmatprep.subr.mxu0 0.0
    %1699 = vmatpush1.msra.mxu0 0.0
    %1700 = vmatprep.subr.mxu0 0.0
    %1701 = vmatpush1.msra.mxu0 0.0
    %1702 = vmatprep.subr.mxu0 0.0
    %1703 = vmatpush1.msra.mxu0 0.0
    %1704 = vmatprep.subr.mxu0 0.0
    %1705 = vmatpush1.msra.mxu0 0.0
    %1706 = vmatprep.subr.mxu0 0.0
    %1707 = vmatpush1.msra.mxu0 0.0
    %1708 = vmatprep.subr.mxu0 0.0
    %1709 = vmatpush1.msra.mxu0 0.0
    %1710 = vmatprep.subr.mxu0 0.0
    %1711 = vmatpush1.msra.mxu0 0.0
    %1712 = vmatprep.mubr.f32.mxu0 0.0
    %1713 = vmatmul.mubr.f32.gmra.mrb[0].mxu0 %v1631
    %v1714 = vpop.f32.mrb[0].mxu0
    %v1715 = vadd.f32 0.0, %v1714
    %v1716 = vpop.f32.mrb[0].mxu0
    %1717 = vdwg.mxu0
    %1718 = vst [vmem:[#allocation9] sm:$0xff] %v1715
    // Predicated region
    $region50: #{tpu_custom_call.1} parent=1 // pred_check
      _
    $region51: #{tpu_custom_call.1} parent=1 // pred_check_branch
      %1720 = sbr.rel (0) target = $region53
    $region52: #{tpu_custom_call.1} parent=1 // pred_region
      %s1722 = ssub.s32 128, 128
      %1723 = vsyncadd [#allocation5], %s1722
      %s1725 = sshll.u32 [#allocation9], 4
      %s1726 = int_to_ptr.vmem [resolvable:$true] %s1725
      %1728 = dma.vmem_to_hbm [thread:$0]  %s1726, 128, %s9, [#allocation5]
    $region53: #{tpu_custom_call.1} parent=1 // pred_fallthru
      _
    // Predicated region
    $region54: #{tpu_custom_call.1} parent=1 // pred_check
      _
    $region55: #{tpu_custom_call.1} parent=1 // pred_check_branch
      %1730 = sbr.rel (0) target = $region57
    $region56: #{tpu_custom_call.1} parent=1 // pred_region
      %1731 = dma.done [#allocation5], 128
    $region57: #{tpu_custom_call.1} parent=1 // pred_fallthru
      _
    %1732 = vsyncpa [#allocation4], 1
    %1733 = vsyncpa [#allocation7], 1
    %1734 = vsyncpa [#allocation5], 1

</llo_original>
